<compile_context>
chip_gen: v6e
topology: v6e:2x2x1
jax: 0.10.0
libtpu: 0.0.40
codegen_flags: <defaults>
</compile_context>

<pallas_src>
import functools

import jax
import jax.numpy as jnp
from jax.experimental import pallas as pl
from jax.experimental.pallas import tpu as pltpu

# Encoder + decoder layer widths (in, out) in order.
LAYER_DIMS = [
    (300, 200), (200, 100), (100, 80), (80, 40), (40, 20), (20, 12),   # encoder
    (12, 20), (20, 40), (40, 80), (80, 100), (100, 200), (200, 300),   # decoder
]

LANE = 128          # lane width: pad every feature dim to a multiple of this
DEFAULT_TM = 256    # batch tile: multiple of 128 (v5e) and 256 (v6e/v7x)


def _round_up(n, m):
    return ((n + m - 1) // m) * m


def autoencoder_kernel(*refs):
    """refs = (x_ref, w0, b0, w1, b1, ..., w11, b11, o_ref).

    x_ref/o_ref are one (TM, padded_feat) batch tile; weights/biases are full
    lane-padded arrays held resident in VMEM (constant index_map), so the whole
    12-layer chain runs fused per batch tile.
    """
    x_ref = refs[0]
    o_ref = refs[-1]
    params = refs[1:-1]
    n_layers = len(params) // 2

    h = x_ref[...]
    for i in range(n_layers):
        w = params[2 * i][...]        # (in_pad, out_pad), zero outside real dims
        b = params[2 * i + 1][...]    # (1, out_pad), zero outside real dims
        y = jnp.dot(h, w, preferred_element_type=jnp.float32) + b
        h = jnp.maximum(y, 0.0)       # ReLU(inplace=True) -> plain ReLU
    o_ref[...] = h.astype(o_ref.dtype)


def init_params(key):
    """Deterministic init mimicking PyTorch nn.Linear default U(-1/sqrt(in), 1/sqrt(in))."""
    params = []
    for (fan_in, fan_out) in LAYER_DIMS:
        key, kw, kb = jax.random.split(key, 3)
        bound = 1.0 / jnp.sqrt(jnp.float32(fan_in))
        # Stored directly as (in, out) == transpose of PyTorch's (out, in) weight.
        w = jax.random.uniform(kw, (fan_in, fan_out), jnp.float32, -bound, bound)
        b = jax.random.uniform(kb, (1, fan_out), jnp.float32, -bound, bound)
        params.append((w, b))
    return params


def _pad_params(params):
    """Zero-pad every (in, out) weight and (1, out) bias to lane (128) multiples.

    Zero rows/cols + zero bias + ReLU keep padded lanes identically zero through
    the whole network, so results on the real lanes are unchanged.
    """
    padded = []
    for (w, b) in params:
        fi, fo = w.shape
        fi_p, fo_p = _round_up(fi, LANE), _round_up(fo, LANE)
        w_p = jnp.zeros((fi_p, fo_p), jnp.float32).at[:fi, :fo].set(w)
        b_p = jnp.zeros((1, fo_p), jnp.float32).at[:, :fo].set(b)
        padded.append((w_p, b_p))
    return padded


@functools.partial(jax.jit, static_argnames=("tm",))
def autoencoder_forward(x, params, tm=DEFAULT_TM):
    batch, in_dim = x.shape
    assert in_dim == LAYER_DIMS[0][0], in_dim
    out_dim = LAYER_DIMS[-1][1]

    padded = _pad_params(params)
    in_pad = padded[0][0].shape[0]      # 384
    out_pad = padded[-1][0].shape[1]    # 384

    # Effective batch tile: clamp to the (sublane-aligned) batch so tiny batches
    # don't pay for a full 256-row tile; real workloads get MXU-aligned tiles.
    tm_eff = min(tm, _round_up(batch, 8))
    batch_pad = _round_up(batch, tm_eff)
    grid = (pl.cdiv(batch_pad, tm_eff),)

    # Lane-pad the input features and row-pad the batch with zeros.
    x_p = jnp.zeros((batch_pad, in_pad), jnp.float32).at[:batch, :in_dim].set(x)

    flat_inputs = [x_p]
    in_specs = [pl.BlockSpec((tm_eff, in_pad), lambda i: (i, 0))]
    for (w, b) in padded:
        flat_inputs += [w, b]
        # Constant index_map -> params stay resident in VMEM across grid steps.
        in_specs += [
            pl.BlockSpec(w.shape, lambda i: (0, 0)),
            pl.BlockSpec(b.shape, lambda i: (0, 0)),
        ]

    flops = 2 * batch_pad * sum(w.shape[0] * w.shape[1] for (w, _) in padded)
    bytes_accessed = (
        x_p.size * 4
        + batch_pad * out_pad * 4
        + sum(w.size * 4 + b.size * 4 for (w, b) in padded)
    )

    out_p = pl.pallas_call(
        autoencoder_kernel,
        out_shape=jax.ShapeDtypeStruct((batch_pad, out_pad), jnp.float32),
        grid=grid,
        in_specs=in_specs,
        out_specs=pl.BlockSpec((tm_eff, out_pad), lambda i: (i, 0)),
        compiler_params=pltpu.CompilerParams(
            # Batch tiles are independent -> shard across v7x's two TensorCores.
            dimension_semantics=("parallel",),
        ),
        cost_estimate=pl.CostEstimate(
            flops=flops, transcendentals=0, bytes_accessed=bytes_accessed),
    )(*flat_inputs)

    # Strip batch padding and lane padding.
    return out_p[:batch, :out_dim]


def reference_forward(x, params):
    h = x
    for (w, b) in params:
        h = jnp.maximum(h @ w + b, 0.0)
    return h


if __name__ == "__main__":
    key = jax.random.PRNGKey(0)
    key, kx = jax.random.split(key)

    batch = 8
    x = jax.random.normal(kx, (batch, 300), jnp.float32)

    params = init_params(key)

    out = autoencoder_forward(x, params)
    out = jax.block_until_ready(out)

    ref = reference_forward(x, params)
    assert out.shape == (batch, 300), out.shape
    assert jnp.allclose(out, ref, atol=1e-5, rtol=1e-5), "mismatch vs pure-JAX reference"

    print("KERNEL_OK")
</pallas_src>

<mosaic_0001>
module attributes {stable_mosaic.version = 11 : i64} {
  func.func @autoencoder_kernel(%arg0: i32, %arg1: memref<8x384xf32, #tpu.memory_space<vmem>>, %arg2: memref<384x256xf32, #tpu.memory_space<vmem>>, %arg3: memref<1x256xf32, #tpu.memory_space<vmem>>, %arg4: memref<256x128xf32, #tpu.memory_space<vmem>>, %arg5: memref<1x128xf32, #tpu.memory_space<vmem>>, %arg6: memref<128x128xf32, #tpu.memory_space<vmem>>, %arg7: memref<1x128xf32, #tpu.memory_space<vmem>>, %arg8: memref<128x128xf32, #tpu.memory_space<vmem>>, %arg9: memref<1x128xf32, #tpu.memory_space<vmem>>, %arg10: memref<128x128xf32, #tpu.memory_space<vmem>>, %arg11: memref<1x128xf32, #tpu.memory_space<vmem>>, %arg12: memref<128x128xf32, #tpu.memory_space<vmem>>, %arg13: memref<1x128xf32, #tpu.memory_space<vmem>>, %arg14: memref<128x128xf32, #tpu.memory_space<vmem>>, %arg15: memref<1x128xf32, #tpu.memory_space<vmem>>, %arg16: memref<128x128xf32, #tpu.memory_space<vmem>>, %arg17: memref<1x128xf32, #tpu.memory_space<vmem>>, %arg18: memref<128x128xf32, #tpu.memory_space<vmem>>, %arg19: memref<1x128xf32, #tpu.memory_space<vmem>>, %arg20: memref<128x128xf32, #tpu.memory_space<vmem>>, %arg21: memref<1x128xf32, #tpu.memory_space<vmem>>, %arg22: memref<128x256xf32, #tpu.memory_space<vmem>>, %arg23: memref<1x256xf32, #tpu.memory_space<vmem>>, %arg24: memref<256x384xf32, #tpu.memory_space<vmem>>, %arg25: memref<1x384xf32, #tpu.memory_space<vmem>>, %arg26: memref<8x384xf32, #tpu.memory_space<vmem>>) attributes {dimension_semantics = [#tpu.dimension_semantics<parallel>], iteration_bounds = array<i64: 1>, scalar_prefetch = 0 : i64, scratch_operands = 0 : i64, tpu.core_type = #tpu.core_type<tc>, window_params = [{transform_indices = @transform_0, window_bounds = array<i64: 8, 384>}, {pipeline_mode = #tpu.pipeline_mode<synchronous>, transform_indices = @transform_1, window_bounds = array<i64: 384, 256>}, {pipeline_mode = #tpu.pipeline_mode<synchronous>, transform_indices = @transform_2, window_bounds = array<i64: 1, 256>}, {pipeline_mode = #tpu.pipeline_mode<synchronous>, transform_indices = @transform_3, window_bounds = array<i64: 256, 128>}, {pipeline_mode = #tpu.pipeline_mode<synchronous>, transform_indices = @transform_4, window_bounds = array<i64: 1, 128>}, {pipeline_mode = #tpu.pipeline_mode<synchronous>, transform_indices = @transform_5, window_bounds = array<i64: 128, 128>}, {pipeline_mode = #tpu.pipeline_mode<synchronous>, transform_indices = @transform_6, window_bounds = array<i64: 1, 128>}, {pipeline_mode = #tpu.pipeline_mode<synchronous>, transform_indices = @transform_7, window_bounds = array<i64: 128, 128>}, {pipeline_mode = #tpu.pipeline_mode<synchronous>, transform_indices = @transform_8, window_bounds = array<i64: 1, 128>}, {pipeline_mode = #tpu.pipeline_mode<synchronous>, transform_indices = @transform_9, window_bounds = array<i64: 128, 128>}, {pipeline_mode = #tpu.pipeline_mode<synchronous>, transform_indices = @transform_10, window_bounds = array<i64: 1, 128>}, {pipeline_mode = #tpu.pipeline_mode<synchronous>, transform_indices = @transform_11, window_bounds = array<i64: 128, 128>}, {pipeline_mode = #tpu.pipeline_mode<synchronous>, transform_indices = @transform_12, window_bounds = array<i64: 1, 128>}, {pipeline_mode = #tpu.pipeline_mode<synchronous>, transform_indices = @transform_13, window_bounds = array<i64: 128, 128>}, {pipeline_mode = #tpu.pipeline_mode<synchronous>, transform_indices = @transform_14, window_bounds = array<i64: 1, 128>}, {pipeline_mode = #tpu.pipeline_mode<synchronous>, transform_indices = @transform_15, window_bounds = array<i64: 128, 128>}, {pipeline_mode = #tpu.pipeline_mode<synchronous>, transform_indices = @transform_16, window_bounds = array<i64: 1, 128>}, {pipeline_mode = #tpu.pipeline_mode<synchronous>, transform_indices = @transform_17, window_bounds = array<i64: 128, 128>}, {pipeline_mode = #tpu.pipeline_mode<synchronous>, transform_indices = @transform_18, window_bounds = array<i64: 1, 128>}, {pipeline_mode = #tpu.pipeline_mode<synchronous>, transform_indices = @transform_19, window_bounds = array<i64: 128, 128>}, {pipeline_mode = #tpu.pipeline_mode<synchronous>, transform_indices = @transform_20, window_bounds = array<i64: 1, 128>}, {pipeline_mode = #tpu.pipeline_mode<synchronous>, transform_indices = @transform_21, window_bounds = array<i64: 128, 256>}, {pipeline_mode = #tpu.pipeline_mode<synchronous>, transform_indices = @transform_22, window_bounds = array<i64: 1, 256>}, {pipeline_mode = #tpu.pipeline_mode<synchronous>, transform_indices = @transform_23, window_bounds = array<i64: 256, 384>}, {pipeline_mode = #tpu.pipeline_mode<synchronous>, transform_indices = @transform_24, window_bounds = array<i64: 1, 384>}, {transform_indices = @transform_25, window_bounds = array<i64: 8, 384>}]} {
    %c0 = arith.constant 0 : index
    %c0_0 = arith.constant 0 : index
    %0 = vector.load %arg1[%c0, %c0_0] : memref<8x384xf32, #tpu.memory_space<vmem>>, vector<8x384xf32>
    %c0_1 = arith.constant 0 : index
    %c0_2 = arith.constant 0 : index
    %1 = vector.load %arg2[%c0_1, %c0_2] : memref<384x256xf32, #tpu.memory_space<vmem>>, vector<384x256xf32>
    %c0_3 = arith.constant 0 : index
    %c0_4 = arith.constant 0 : index
    %2 = vector.load %arg3[%c0_3, %c0_4] : memref<1x256xf32, #tpu.memory_space<vmem>>, vector<1x256xf32>
    %cst = arith.constant dense<0.000000e+00> : vector<8x256xf32>
    %3 = tpu.matmul %0, %1, %cst {dimension_numbers = #tpu.dot_dimension_numbers<[1], [0], [0], [1], [0, 0, 1, 1], [], []>} : vector<8x384xf32>, vector<384x256xf32>, vector<8x256xf32> -> vector<8x256xf32>
    %4 = vector.broadcast %2 : vector<1x256xf32> to vector<8x256xf32>
    %5 = arith.addf %3, %4 : vector<8x256xf32>
    %cst_5 = arith.constant 0.000000e+00 : f32
    %6 = vector.broadcast %cst_5 : f32 to vector<8x256xf32>
    %7 = arith.maximumf %5, %6 : vector<8x256xf32>
    %c0_6 = arith.constant 0 : index
    %c0_7 = arith.constant 0 : index
    %8 = vector.load %arg4[%c0_6, %c0_7] : memref<256x128xf32, #tpu.memory_space<vmem>>, vector<256x128xf32>
    %c0_8 = arith.constant 0 : index
    %c0_9 = arith.constant 0 : index
    %9 = vector.load %arg5[%c0_8, %c0_9] : memref<1x128xf32, #tpu.memory_space<vmem>>, vector<1x128xf32>
    %cst_10 = arith.constant dense<0.000000e+00> : vector<8x128xf32>
    %10 = tpu.matmul %7, %8, %cst_10 {dimension_numbers = #tpu.dot_dimension_numbers<[1], [0], [0], [1], [0, 0, 1, 1], [], []>} : vector<8x256xf32>, vector<256x128xf32>, vector<8x128xf32> -> vector<8x128xf32>
    %11 = vector.broadcast %9 : vector<1x128xf32> to vector<8x128xf32>
    %12 = arith.addf %10, %11 : vector<8x128xf32>
    %cst_11 = arith.constant 0.000000e+00 : f32
    %13 = vector.broadcast %cst_11 : f32 to vector<8x128xf32>
    %14 = arith.maximumf %12, %13 : vector<8x128xf32>
    %c0_12 = arith.constant 0 : index
    %c0_13 = arith.constant 0 : index
    %15 = vector.load %arg6[%c0_12, %c0_13] : memref<128x128xf32, #tpu.memory_space<vmem>>, vector<128x128xf32>
    %c0_14 = arith.constant 0 : index
    %c0_15 = arith.constant 0 : index
    %16 = vector.load %arg7[%c0_14, %c0_15] : memref<1x128xf32, #tpu.memory_space<vmem>>, vector<1x128xf32>
    %cst_16 = arith.constant dense<0.000000e+00> : vector<8x128xf32>
    %17 = tpu.matmul %14, %15, %cst_16 {dimension_numbers = #tpu.dot_dimension_numbers<[1], [0], [0], [1], [0, 0, 1, 1], [], []>} : vector<8x128xf32>, vector<128x128xf32>, vector<8x128xf32> -> vector<8x128xf32>
    %18 = vector.broadcast %16 : vector<1x128xf32> to vector<8x128xf32>
    %19 = arith.addf %17, %18 : vector<8x128xf32>
    %cst_17 = arith.constant 0.000000e+00 : f32
    %20 = vector.broadcast %cst_17 : f32 to vector<8x128xf32>
    %21 = arith.maximumf %19, %20 : vector<8x128xf32>
    %c0_18 = arith.constant 0 : index
    %c0_19 = arith.constant 0 : index
    %22 = vector.load %arg8[%c0_18, %c0_19] : memref<128x128xf32, #tpu.memory_space<vmem>>, vector<128x128xf32>
    %c0_20 = arith.constant 0 : index
    %c0_21 = arith.constant 0 : index
    %23 = vector.load %arg9[%c0_20, %c0_21] : memref<1x128xf32, #tpu.memory_space<vmem>>, vector<1x128xf32>
    %cst_22 = arith.constant dense<0.000000e+00> : vector<8x128xf32>
    %24 = tpu.matmul %21, %22, %cst_22 {dimension_numbers = #tpu.dot_dimension_numbers<[1], [0], [0], [1], [0, 0, 1, 1], [], []>} : vector<8x128xf32>, vector<128x128xf32>, vector<8x128xf32> -> vector<8x128xf32>
    %25 = vector.broadcast %23 : vector<1x128xf32> to vector<8x128xf32>
    %26 = arith.addf %24, %25 : vector<8x128xf32>
    %cst_23 = arith.constant 0.000000e+00 : f32
    %27 = vector.broadcast %cst_23 : f32 to vector<8x128xf32>
    %28 = arith.maximumf %26, %27 : vector<8x128xf32>
    %c0_24 = arith.constant 0 : index
    %c0_25 = arith.constant 0 : index
    %29 = vector.load %arg10[%c0_24, %c0_25] : memref<128x128xf32, #tpu.memory_space<vmem>>, vector<128x128xf32>
    %c0_26 = arith.constant 0 : index
    %c0_27 = arith.constant 0 : index
    %30 = vector.load %arg11[%c0_26, %c0_27] : memref<1x128xf32, #tpu.memory_space<vmem>>, vector<1x128xf32>
    %cst_28 = arith.constant dense<0.000000e+00> : vector<8x128xf32>
    %31 = tpu.matmul %28, %29, %cst_28 {dimension_numbers = #tpu.dot_dimension_numbers<[1], [0], [0], [1], [0, 0, 1, 1], [], []>} : vector<8x128xf32>, vector<128x128xf32>, vector<8x128xf32> -> vector<8x128xf32>
    %32 = vector.broadcast %30 : vector<1x128xf32> to vector<8x128xf32>
    %33 = arith.addf %31, %32 : vector<8x128xf32>
    %cst_29 = arith.constant 0.000000e+00 : f32
    %34 = vector.broadcast %cst_29 : f32 to vector<8x128xf32>
    %35 = arith.maximumf %33, %34 : vector<8x128xf32>
    %c0_30 = arith.constant 0 : index
    %c0_31 = arith.constant 0 : index
    %36 = vector.load %arg12[%c0_30, %c0_31] : memref<128x128xf32, #tpu.memory_space<vmem>>, vector<128x128xf32>
    %c0_32 = arith.constant 0 : index
    %c0_33 = arith.constant 0 : index
    %37 = vector.load %arg13[%c0_32, %c0_33] : memref<1x128xf32, #tpu.memory_space<vmem>>, vector<1x128xf32>
    %cst_34 = arith.constant dense<0.000000e+00> : vector<8x128xf32>
    %38 = tpu.matmul %35, %36, %cst_34 {dimension_numbers = #tpu.dot_dimension_numbers<[1], [0], [0], [1], [0, 0, 1, 1], [], []>} : vector<8x128xf32>, vector<128x128xf32>, vector<8x128xf32> -> vector<8x128xf32>
    %39 = vector.broadcast %37 : vector<1x128xf32> to vector<8x128xf32>
    %40 = arith.addf %38, %39 : vector<8x128xf32>
    %cst_35 = arith.constant 0.000000e+00 : f32
    %41 = vector.broadcast %cst_35 : f32 to vector<8x128xf32>
    %42 = arith.maximumf %40, %41 : vector<8x128xf32>
    %c0_36 = arith.constant 0 : index
    %c0_37 = arith.constant 0 : index
    %43 = vector.load %arg14[%c0_36, %c0_37] : memref<128x128xf32, #tpu.memory_space<vmem>>, vector<128x128xf32>
    %c0_38 = arith.constant 0 : index
    %c0_39 = arith.constant 0 : index
    %44 = vector.load %arg15[%c0_38, %c0_39] : memref<1x128xf32, #tpu.memory_space<vmem>>, vector<1x128xf32>
    %cst_40 = arith.constant dense<0.000000e+00> : vector<8x128xf32>
    %45 = tpu.matmul %42, %43, %cst_40 {dimension_numbers = #tpu.dot_dimension_numbers<[1], [0], [0], [1], [0, 0, 1, 1], [], []>} : vector<8x128xf32>, vector<128x128xf32>, vector<8x128xf32> -> vector<8x128xf32>
    %46 = vector.broadcast %44 : vector<1x128xf32> to vector<8x128xf32>
    %47 = arith.addf %45, %46 : vector<8x128xf32>
    %cst_41 = arith.constant 0.000000e+00 : f32
    %48 = vector.broadcast %cst_41 : f32 to vector<8x128xf32>
    %49 = arith.maximumf %47, %48 : vector<8x128xf32>
    %c0_42 = arith.constant 0 : index
    %c0_43 = arith.constant 0 : index
    %50 = vector.load %arg16[%c0_42, %c0_43] : memref<128x128xf32, #tpu.memory_space<vmem>>, vector<128x128xf32>
    %c0_44 = arith.constant 0 : index
    %c0_45 = arith.constant 0 : index
    %51 = vector.load %arg17[%c0_44, %c0_45] : memref<1x128xf32, #tpu.memory_space<vmem>>, vector<1x128xf32>
    %cst_46 = arith.constant dense<0.000000e+00> : vector<8x128xf32>
    %52 = tpu.matmul %49, %50, %cst_46 {dimension_numbers = #tpu.dot_dimension_numbers<[1], [0], [0], [1], [0, 0, 1, 1], [], []>} : vector<8x128xf32>, vector<128x128xf32>, vector<8x128xf32> -> vector<8x128xf32>
    %53 = vector.broadcast %51 : vector<1x128xf32> to vector<8x128xf32>
    %54 = arith.addf %52, %53 : vector<8x128xf32>
    %cst_47 = arith.constant 0.000000e+00 : f32
    %55 = vector.broadcast %cst_47 : f32 to vector<8x128xf32>
    %56 = arith.maximumf %54, %55 : vector<8x128xf32>
    %c0_48 = arith.constant 0 : index
    %c0_49 = arith.constant 0 : index
    %57 = vector.load %arg18[%c0_48, %c0_49] : memref<128x128xf32, #tpu.memory_space<vmem>>, vector<128x128xf32>
    %c0_50 = arith.constant 0 : index
    %c0_51 = arith.constant 0 : index
    %58 = vector.load %arg19[%c0_50, %c0_51] : memref<1x128xf32, #tpu.memory_space<vmem>>, vector<1x128xf32>
    %cst_52 = arith.constant dense<0.000000e+00> : vector<8x128xf32>
    %59 = tpu.matmul %56, %57, %cst_52 {dimension_numbers = #tpu.dot_dimension_numbers<[1], [0], [0], [1], [0, 0, 1, 1], [], []>} : vector<8x128xf32>, vector<128x128xf32>, vector<8x128xf32> -> vector<8x128xf32>
    %60 = vector.broadcast %58 : vector<1x128xf32> to vector<8x128xf32>
    %61 = arith.addf %59, %60 : vector<8x128xf32>
    %cst_53 = arith.constant 0.000000e+00 : f32
    %62 = vector.broadcast %cst_53 : f32 to vector<8x128xf32>
    %63 = arith.maximumf %61, %62 : vector<8x128xf32>
    %c0_54 = arith.constant 0 : index
    %c0_55 = arith.constant 0 : index
    %64 = vector.load %arg20[%c0_54, %c0_55] : memref<128x128xf32, #tpu.memory_space<vmem>>, vector<128x128xf32>
    %c0_56 = arith.constant 0 : index
    %c0_57 = arith.constant 0 : index
    %65 = vector.load %arg21[%c0_56, %c0_57] : memref<1x128xf32, #tpu.memory_space<vmem>>, vector<1x128xf32>
    %cst_58 = arith.constant dense<0.000000e+00> : vector<8x128xf32>
    %66 = tpu.matmul %63, %64, %cst_58 {dimension_numbers = #tpu.dot_dimension_numbers<[1], [0], [0], [1], [0, 0, 1, 1], [], []>} : vector<8x128xf32>, vector<128x128xf32>, vector<8x128xf32> -> vector<8x128xf32>
    %67 = vector.broadcast %65 : vector<1x128xf32> to vector<8x128xf32>
    %68 = arith.addf %66, %67 : vector<8x128xf32>
    %cst_59 = arith.constant 0.000000e+00 : f32
    %69 = vector.broadcast %cst_59 : f32 to vector<8x128xf32>
    %70 = arith.maximumf %68, %69 : vector<8x128xf32>
    %c0_60 = arith.constant 0 : index
    %c0_61 = arith.constant 0 : index
    %71 = vector.load %arg22[%c0_60, %c0_61] : memref<128x256xf32, #tpu.memory_space<vmem>>, vector<128x256xf32>
    %c0_62 = arith.constant 0 : index
    %c0_63 = arith.constant 0 : index
    %72 = vector.load %arg23[%c0_62, %c0_63] : memref<1x256xf32, #tpu.memory_space<vmem>>, vector<1x256xf32>
    %cst_64 = arith.constant dense<0.000000e+00> : vector<8x256xf32>
    %73 = tpu.matmul %70, %71, %cst_64 {dimension_numbers = #tpu.dot_dimension_numbers<[1], [0], [0], [1], [0, 0, 1, 1], [], []>} : vector<8x128xf32>, vector<128x256xf32>, vector<8x256xf32> -> vector<8x256xf32>
    %74 = vector.broadcast %72 : vector<1x256xf32> to vector<8x256xf32>
    %75 = arith.addf %73, %74 : vector<8x256xf32>
    %cst_65 = arith.constant 0.000000e+00 : f32
    %76 = vector.broadcast %cst_65 : f32 to vector<8x256xf32>
    %77 = arith.maximumf %75, %76 : vector<8x256xf32>
    %c0_66 = arith.constant 0 : index
    %c0_67 = arith.constant 0 : index
    %78 = vector.load %arg24[%c0_66, %c0_67] : memref<256x384xf32, #tpu.memory_space<vmem>>, vector<256x384xf32>
    %c0_68 = arith.constant 0 : index
    %c0_69 = arith.constant 0 : index
    %79 = vector.load %arg25[%c0_68, %c0_69] : memref<1x384xf32, #tpu.memory_space<vmem>>, vector<1x384xf32>
    %cst_70 = arith.constant dense<0.000000e+00> : vector<8x384xf32>
    %80 = tpu.matmul %77, %78, %cst_70 {dimension_numbers = #tpu.dot_dimension_numbers<[1], [0], [0], [1], [0, 0, 1, 1], [], []>} : vector<8x256xf32>, vector<256x384xf32>, vector<8x384xf32> -> vector<8x384xf32>
    %81 = vector.broadcast %79 : vector<1x384xf32> to vector<8x384xf32>
    %82 = arith.addf %80, %81 : vector<8x384xf32>
    %cst_71 = arith.constant 0.000000e+00 : f32
    %83 = vector.broadcast %cst_71 : f32 to vector<8x384xf32>
    %84 = arith.maximumf %82, %83 : vector<8x384xf32>
    %c0_72 = arith.constant 0 : index
    %c0_73 = arith.constant 0 : index
    %85 = vector.load %arg26[%c0_72, %c0_73] : memref<8x384xf32, #tpu.memory_space<vmem>>, vector<8x384xf32>
    tpu.vector_store %arg26[%c0_72, %c0_73], %84 {strides = array<i32>} : memref<8x384xf32, #tpu.memory_space<vmem>>, vector<8x384xf32>,
    return
  }
  func.func @transform_0(%arg0: i32) -> (i32, i32) {
    %c0_i32 = arith.constant 0 : i32
    %c0_i32_0 = arith.constant 0 : i32
    return %arg0, %c0_i32 : i32, i32
  }
  func.func @transform_1(%arg0: i32) -> (i32, i32) {
    %c0_i32 = arith.constant 0 : i32
    %c0_i32_0 = arith.constant 0 : i32
    %c0_i32_1 = arith.constant 0 : i32
    return %c0_i32, %c0_i32_0 : i32, i32
  }
  func.func @transform_2(%arg0: i32) -> (i32, i32) {
    %c0_i32 = arith.constant 0 : i32
    %c0_i32_0 = arith.constant 0 : i32
    %c0_i32_1 = arith.constant 0 : i32
    return %c0_i32, %c0_i32_0 : i32, i32
  }
  func.func @transform_3(%arg0: i32) -> (i32, i32) {
    %c0_i32 = arith.constant 0 : i32
    %c0_i32_0 = arith.constant 0 : i32
    %c0_i32_1 = arith.constant 0 : i32
    return %c0_i32, %c0_i32_0 : i32, i32
  }
  func.func @transform_4(%arg0: i32) -> (i32, i32) {
    %c0_i32 = arith.constant 0 : i32
    %c0_i32_0 = arith.constant 0 : i32
    %c0_i32_1 = arith.constant 0 : i32
    return %c0_i32, %c0_i32_0 : i32, i32
  }
  func.func @transform_5(%arg0: i32) -> (i32, i32) {
    %c0_i32 = arith.constant 0 : i32
    %c0_i32_0 = arith.constant 0 : i32
    %c0_i32_1 = arith.constant 0 : i32
    return %c0_i32, %c0_i32_0 : i32, i32
  }
  func.func @transform_6(%arg0: i32) -> (i32, i32) {
    %c0_i32 = arith.constant 0 : i32
    %c0_i32_0 = arith.constant 0 : i32
    %c0_i32_1 = arith.constant 0 : i32
    return %c0_i32, %c0_i32_0 : i32, i32
  }
  func.func @transform_7(%arg0: i32) -> (i32, i32) {
    %c0_i32 = arith.constant 0 : i32
    %c0_i32_0 = arith.constant 0 : i32
    %c0_i32_1 = arith.constant 0 : i32
    return %c0_i32, %c0_i32_0 : i32, i32
  }
  func.func @transform_8(%arg0: i32) -> (i32, i32) {
    %c0_i32 = arith.constant 0 : i32
    %c0_i32_0 = arith.constant 0 : i32
    %c0_i32_1 = arith.constant 0 : i32
    return %c0_i32, %c0_i32_0 : i32, i32
  }
  func.func @transform_9(%arg0: i32) -> (i32, i32) {
    %c0_i32 = arith.constant 0 : i32
    %c0_i32_0 = arith.constant 0 : i32
    %c0_i32_1 = arith.constant 0 : i32
    return %c0_i32, %c0_i32_0 : i32, i32
  }
  func.func @transform_10(%arg0: i32) -> (i32, i32) {
    %c0_i32 = arith.constant 0 : i32
    %c0_i32_0 = arith.constant 0 : i32
    %c0_i32_1 = arith.constant 0 : i32
    return %c0_i32, %c0_i32_0 : i32, i32
  }
  func.func @transform_11(%arg0: i32) -> (i32, i32) {
    %c0_i32 = arith.constant 0 : i32
    %c0_i32_0 = arith.constant 0 : i32
    %c0_i32_1 = arith.constant 0 : i32
    return %c0_i32, %c0_i32_0 : i32, i32
  }
  func.func @transform_12(%arg0: i32) -> (i32, i32) {
    %c0_i32 = arith.constant 0 : i32
    %c0_i32_0 = arith.constant 0 : i32
    %c0_i32_1 = arith.constant 0 : i32
    return %c0_i32, %c0_i32_0 : i32, i32
  }
  func.func @transform_13(%arg0: i32) -> (i32, i32) {
    %c0_i32 = arith.constant 0 : i32
    %c0_i32_0 = arith.constant 0 : i32
    %c0_i32_1 = arith.constant 0 : i32
    return %c0_i32, %c0_i32_0 : i32, i32
  }
  func.func @transform_14(%arg0: i32) -> (i32, i32) {
    %c0_i32 = arith.constant 0 : i32
    %c0_i32_0 = arith.constant 0 : i32
    %c0_i32_1 = arith.constant 0 : i32
    return %c0_i32, %c0_i32_0 : i32, i32
  }
  func.func @transform_15(%arg0: i32) -> (i32, i32) {
    %c0_i32 = arith.constant 0 : i32
    %c0_i32_0 = arith.constant 0 : i32
    %c0_i32_1 = arith.constant 0 : i32
    return %c0_i32, %c0_i32_0 : i32, i32
  }
  func.func @transform_16(%arg0: i32) -> (i32, i32) {
    %c0_i32 = arith.constant 0 : i32
    %c0_i32_0 = arith.constant 0 : i32
    %c0_i32_1 = arith.constant 0 : i32
    return %c0_i32, %c0_i32_0 : i32, i32
  }
  func.func @transform_17(%arg0: i32) -> (i32, i32) {
    %c0_i32 = arith.constant 0 : i32
    %c0_i32_0 = arith.constant 0 : i32
    %c0_i32_1 = arith.constant 0 : i32
    return %c0_i32, %c0_i32_0 : i32, i32
  }
  func.func @transform_18(%arg0: i32) -> (i32, i32) {
    %c0_i32 = arith.constant 0 : i32
    %c0_i32_0 = arith.constant 0 : i32
    %c0_i32_1 = arith.constant 0 : i32
    return %c0_i32, %c0_i32_0 : i32, i32
  }
  func.func @transform_19(%arg0: i32) -> (i32, i32) {
    %c0_i32 = arith.constant 0 : i32
    %c0_i32_0 = arith.constant 0 : i32
    %c0_i32_1 = arith.constant 0 : i32
    return %c0_i32, %c0_i32_0 : i32, i32
  }
  func.func @transform_20(%arg0: i32) -> (i32, i32) {
    %c0_i32 = arith.constant 0 : i32
    %c0_i32_0 = arith.constant 0 : i32
    %c0_i32_1 = arith.constant 0 : i32
    return %c0_i32, %c0_i32_0 : i32, i32
  }
  func.func @transform_21(%arg0: i32) -> (i32, i32) {
    %c0_i32 = arith.constant 0 : i32
    %c0_i32_0 = arith.constant 0 : i32
    %c0_i32_1 = arith.constant 0 : i32
    return %c0_i32, %c0_i32_0 : i32, i32
  }
  func.func @transform_22(%arg0: i32) -> (i32, i32) {
    %c0_i32 = arith.constant 0 : i32
    %c0_i32_0 = arith.constant 0 : i32
    %c0_i32_1 = arith.constant 0 : i32
    return %c0_i32, %c0_i32_0 : i32, i32
  }
  func.func @transform_23(%arg0: i32) -> (i32, i32) {
    %c0_i32 = arith.constant 0 : i32
    %c0_i32_0 = arith.constant 0 : i32
    %c0_i32_1 = arith.constant 0 : i32
    return %c0_i32, %c0_i32_0 : i32, i32
  }
  func.func @transform_24(%arg0: i32) -> (i32, i32) {
    %c0_i32 = arith.constant 0 : i32
    %c0_i32_0 = arith.constant 0 : i32
    %c0_i32_1 = arith.constant 0 : i32
    return %c0_i32, %c0_i32_0 : i32, i32
  }
  func.func @transform_25(%arg0: i32) -> (i32, i32) {
    %c0_i32 = arith.constant 0 : i32
    %c0_i32_0 = arith.constant 0 : i32
    return %arg0, %c0_i32 : i32, i32
  }
}

</mosaic_0001>

<llo_original>
// kernel: autoencoder_forward.1
$region0: #{autoencoder_forward.1}
  #allocation0 [shape = 'u32[]', space=smem, size = 0x4, offset = 0x4, fixed_abs, tag = 'smem constant byte address 0x4 - core index']
  #allocation1 [shape = 'u32[144,128]{1,0:T(1,128)}', space=vmem, size = 0x12000, scoped, tag = 'internal scratch']
  %s0 = inlined_call_operand.vmem [shape: f32[8,384], index: 0, kind: input, shape index: {}]
  %s1 = inlined_call_operand.vmem [shape: f32[384,256], index: 1, kind: input, shape index: {}]
  %s2 = inlined_call_operand.vmem [shape: f32[1,256], index: 2, kind: input, shape index: {}]
  %s3 = inlined_call_operand.vmem [shape: f32[256,128], index: 3, kind: input, shape index: {}]
  %s4 = inlined_call_operand.vmem [shape: f32[1,128], index: 4, kind: input, shape index: {}]
  %s5 = inlined_call_operand.vmem [shape: f32[128,128], index: 5, kind: input, shape index: {}]
  %s6 = inlined_call_operand.vmem [shape: f32[1,128], index: 6, kind: input, shape index: {}]
  %s7 = inlined_call_operand.vmem [shape: f32[128,128], index: 7, kind: input, shape index: {}]
  %s8 = inlined_call_operand.vmem [shape: f32[1,128], index: 8, kind: input, shape index: {}]
  %s9 = inlined_call_operand.vmem [shape: f32[128,128], index: 9, kind: input, shape index: {}]
  %s10 = inlined_call_operand.vmem [shape: f32[1,128], index: 10, kind: input, shape index: {}]
  %s11 = inlined_call_operand.vmem [shape: f32[128,128], index: 11, kind: input, shape index: {}]
  %s12 = inlined_call_operand.vmem [shape: f32[1,128], index: 12, kind: input, shape index: {}]
  %s13 = inlined_call_operand.vmem [shape: f32[128,128], index: 13, kind: input, shape index: {}]
  %s14 = inlined_call_operand.vmem [shape: f32[1,128], index: 14, kind: input, shape index: {}]
  %s15 = inlined_call_operand.vmem [shape: f32[128,128], index: 15, kind: input, shape index: {}]
  %s16 = inlined_call_operand.vmem [shape: f32[1,128], index: 16, kind: input, shape index: {}]
  %s17 = inlined_call_operand.vmem [shape: f32[128,128], index: 17, kind: input, shape index: {}]
  %s18 = inlined_call_operand.vmem [shape: f32[1,128], index: 18, kind: input, shape index: {}]
  %s19 = inlined_call_operand.vmem [shape: f32[128,128], index: 19, kind: input, shape index: {}]
  %s20 = inlined_call_operand.vmem [shape: f32[1,128], index: 20, kind: input, shape index: {}]
  %s21 = inlined_call_operand.vmem [shape: f32[128,256], index: 21, kind: input, shape index: {}]
  %s22 = inlined_call_operand.vmem [shape: f32[1,256], index: 22, kind: input, shape index: {}]
  %s23 = inlined_call_operand.vmem [shape: f32[256,384], index: 23, kind: input, shape index: {}]
  %s24 = inlined_call_operand.vmem [shape: f32[1,384], index: 24, kind: input, shape index: {}]
  %s25 = inlined_call_operand.hbm [shape: f32[8,384], index: 25, kind: output, shape index: {}]
  %s26 = sld [smem:[#allocation0]]
  $region110: #{autoencoder_forward.1} parent=0
    _
  %s28 = ssub.s32 1, %s26
  %s29 = scalar_select 0, %s28, %s26
  $region1: #{autoencoder_forward.1} parent=0
    #allocation2 [shape = 'u8[12288]{0}', space=vmem, size = 0x3000, scoped, tag = 'output window, operand 0, single buffered']
    #allocation3 [shape = 's32[1]{0}', space=sflag, size = 0x4, scoped, tag = 'scoped memory for autoencoder_forward.1']
    %30 = vsyncpa [#allocation3], 0
    // Predicated region
    $region2: #{autoencoder_forward.1} parent=1 // pred_check
      _
    $region3: #{autoencoder_forward.1} parent=1 // pred_check_branch
      %32 = sbr.rel (0) target = $region5
    $region4: #{autoencoder_forward.1} parent=1 // pred_region
      _
    $region5: #{autoencoder_forward.1} parent=1 // pred_fallthru
      _
    // Predicated region
    $region6: #{autoencoder_forward.1} parent=1 // pred_check
      _
    $region7: #{autoencoder_forward.1} parent=1 // pred_check_branch
      %34 = sbr.rel (0) target = $region9
    $region8: #{autoencoder_forward.1} parent=1 // pred_region
      _
    $region9: #{autoencoder_forward.1} parent=1 // pred_fallthru
      _
    // Predicated region
    $region10: #{autoencoder_forward.1} parent=1 // pred_check
      _
    $region11: #{autoencoder_forward.1} parent=1 // pred_check_branch
      %36 = sbr.rel (0) target = $region13
    $region12: #{autoencoder_forward.1} parent=1 // pred_region
      _
    $region13: #{autoencoder_forward.1} parent=1 // pred_fallthru
      _
    // Predicated region
    $region14: #{autoencoder_forward.1} parent=1 // pred_check
      _
    $region15: #{autoencoder_forward.1} parent=1 // pred_check_branch
      %38 = sbr.rel (0) target = $region17
    $region16: #{autoencoder_forward.1} parent=1 // pred_region
      _
    $region17: #{autoencoder_forward.1} parent=1 // pred_fallthru
      _
    // Predicated region
    $region18: #{autoencoder_forward.1} parent=1 // pred_check
      _
    $region19: #{autoencoder_forward.1} parent=1 // pred_check_branch
      %40 = sbr.rel (0) target = $region21
    $region20: #{autoencoder_forward.1} parent=1 // pred_region
      _
    $region21: #{autoencoder_forward.1} parent=1 // pred_fallthru
      _
    // Predicated region
    $region22: #{autoencoder_forward.1} parent=1 // pred_check
      _
    $region23: #{autoencoder_forward.1} parent=1 // pred_check_branch
      %42 = sbr.rel (0) target = $region25
    $region24: #{autoencoder_forward.1} parent=1 // pred_region
      _
    $region25: #{autoencoder_forward.1} parent=1 // pred_fallthru
      _
    // Predicated region
    $region26: #{autoencoder_forward.1} parent=1 // pred_check
      _
    $region27: #{autoencoder_forward.1} parent=1 // pred_check_branch
      %44 = sbr.rel (0) target = $region29
    $region28: #{autoencoder_forward.1} parent=1 // pred_region
      _
    $region29: #{autoencoder_forward.1} parent=1 // pred_fallthru
      _
    // Predicated region
    $region30: #{autoencoder_forward.1} parent=1 // pred_check
      _
    $region31: #{autoencoder_forward.1} parent=1 // pred_check_branch
      %46 = sbr.rel (0) target = $region33
    $region32: #{autoencoder_forward.1} parent=1 // pred_region
      _
    $region33: #{autoencoder_forward.1} parent=1 // pred_fallthru
      _
    // Predicated region
    $region34: #{autoencoder_forward.1} parent=1 // pred_check
      _
    $region35: #{autoencoder_forward.1} parent=1 // pred_check_branch
      %48 = sbr.rel (0) target = $region37
    $region36: #{autoencoder_forward.1} parent=1 // pred_region
      _
    $region37: #{autoencoder_forward.1} parent=1 // pred_fallthru
      _
    // Predicated region
    $region38: #{autoencoder_forward.1} parent=1 // pred_check
      _
    $region39: #{autoencoder_forward.1} parent=1 // pred_check_branch
      %50 = sbr.rel (0) target = $region41
    $region40: #{autoencoder_forward.1} parent=1 // pred_region
      _
    $region41: #{autoencoder_forward.1} parent=1 // pred_fallthru
      _
    // Predicated region
    $region42: #{autoencoder_forward.1} parent=1 // pred_check
      _
    $region43: #{autoencoder_forward.1} parent=1 // pred_check_branch
      %52 = sbr.rel (0) target = $region45
    $region44: #{autoencoder_forward.1} parent=1 // pred_region
      _
    $region45: #{autoencoder_forward.1} parent=1 // pred_fallthru
      _
    // Predicated region
    $region46: #{autoencoder_forward.1} parent=1 // pred_check
      _
    $region47: #{autoencoder_forward.1} parent=1 // pred_check_branch
      %54 = sbr.rel (0) target = $region49
    $region48: #{autoencoder_forward.1} parent=1 // pred_region
      _
    $region49: #{autoencoder_forward.1} parent=1 // pred_fallthru
      _
    // Predicated region
    $region50: #{autoencoder_forward.1} parent=1 // pred_check
      _
    $region51: #{autoencoder_forward.1} parent=1 // pred_check_branch
      %56 = sbr.rel (0) target = $region53
    $region52: #{autoencoder_forward.1} parent=1 // pred_region
      _
    $region53: #{autoencoder_forward.1} parent=1 // pred_fallthru
      _
    // Predicated region
    $region54: #{autoencoder_forward.1} parent=1 // pred_check
      _
    $region55: #{autoencoder_forward.1} parent=1 // pred_check_branch
      %58 = sbr.rel (0) target = $region57
    $region56: #{autoencoder_forward.1} parent=1 // pred_region
      _
    $region57: #{autoencoder_forward.1} parent=1 // pred_fallthru
      _
    // Predicated region
    $region58: #{autoencoder_forward.1} parent=1 // pred_check
      _
    $region59: #{autoencoder_forward.1} parent=1 // pred_check_branch
      %60 = sbr.rel (0) target = $region61
    $region60: #{autoencoder_forward.1} parent=1 // pred_region
      _
    $region61: #{autoencoder_forward.1} parent=1 // pred_fallthru
      _
    // Predicated region
    $region62: #{autoencoder_forward.1} parent=1 // pred_check
      _
    $region63: #{autoencoder_forward.1} parent=1 // pred_check_branch
      %62 = sbr.rel (0) target = $region65
    $region64: #{autoencoder_forward.1} parent=1 // pred_region
      _
    $region65: #{autoencoder_forward.1} parent=1 // pred_fallthru
      _
    // Predicated region
    $region66: #{autoencoder_forward.1} parent=1 // pred_check
      _
    $region67: #{autoencoder_forward.1} parent=1 // pred_check_branch
      %64 = sbr.rel (0) target = $region69
    $region68: #{autoencoder_forward.1} parent=1 // pred_region
      _
    $region69: #{autoencoder_forward.1} parent=1 // pred_fallthru
      _
    // Predicated region
    $region70: #{autoencoder_forward.1} parent=1 // pred_check
      _
    $region71: #{autoencoder_forward.1} parent=1 // pred_check_branch
      %66 = sbr.rel (0) target = $region73
    $region72: #{autoencoder_forward.1} parent=1 // pred_region
      _
    $region73: #{autoencoder_forward.1} parent=1 // pred_fallthru
      _
    // Predicated region
    $region74: #{autoencoder_forward.1} parent=1 // pred_check
      _
    $region75: #{autoencoder_forward.1} parent=1 // pred_check_branch
      %68 = sbr.rel (0) target = $region77
    $region76: #{autoencoder_forward.1} parent=1 // pred_region
      _
    $region77: #{autoencoder_forward.1} parent=1 // pred_fallthru
      _
    // Predicated region
    $region78: #{autoencoder_forward.1} parent=1 // pred_check
      _
    $region79: #{autoencoder_forward.1} parent=1 // pred_check_branch
      %70 = sbr.rel (0) target = $region81
    $region80: #{autoencoder_forward.1} parent=1 // pred_region
      _
    $region81: #{autoencoder_forward.1} parent=1 // pred_fallthru
      _
    // Predicated region
    $region82: #{autoencoder_forward.1} parent=1 // pred_check
      _
    $region83: #{autoencoder_forward.1} parent=1 // pred_check_branch
      %72 = sbr.rel (0) target = $region85
    $region84: #{autoencoder_forward.1} parent=1 // pred_region
      _
    $region85: #{autoencoder_forward.1} parent=1 // pred_fallthru
      _
    // Predicated region
    $region86: #{autoencoder_forward.1} parent=1 // pred_check
      _
    $region87: #{autoencoder_forward.1} parent=1 // pred_check_branch
      %74 = sbr.rel (0) target = $region89
    $region88: #{autoencoder_forward.1} parent=1 // pred_region
      _
    $region89: #{autoencoder_forward.1} parent=1 // pred_fallthru
      _
    // Predicated region
    $region90: #{autoencoder_forward.1} parent=1 // pred_check
      _
    $region91: #{autoencoder_forward.1} parent=1 // pred_check_branch
      %76 = sbr.rel (0) target = $region93
    $region92: #{autoencoder_forward.1} parent=1 // pred_region
      _
    $region93: #{autoencoder_forward.1} parent=1 // pred_fallthru
      _
    // Predicated region
    $region94: #{autoencoder_forward.1} parent=1 // pred_check
      _
    $region95: #{autoencoder_forward.1} parent=1 // pred_check_branch
      %78 = sbr.rel (0) target = $region97
    $region96: #{autoencoder_forward.1} parent=1 // pred_region
      _
    $region97: #{autoencoder_forward.1} parent=1 // pred_fallthru
      _
    // Predicated region
    $region98: #{autoencoder_forward.1} parent=1 // pred_check
      _
    $region99: #{autoencoder_forward.1} parent=1 // pred_check_branch
      %80 = sbr.rel (0) target = $region101
    $region100: #{autoencoder_forward.1} parent=1 // pred_region
      _
    $region101: #{autoencoder_forward.1} parent=1 // pred_fallthru
      _
    %v81 = vld [vmem:[%s0] sm:$0xff]
    %v82 = vld [vmem:[%s0 + $0x8] sm:$0xff]
    %v83 = vld [vmem:[%s0 + $0x10] sm:$0xff]
    %v84 = vld [vmem:[%s1] sm:$0xff]
    %v85 = vld [vmem:[%s1 + $0x8] sm:$0xff]
    %v86 = vld [vmem:[%s1 + $0x10] sm:$0xff]
    %v87 = vld [vmem:[%s1 + $0x18] sm:$0xff]
    %v88 = vld [vmem:[%s1 + $0x20] sm:$0xff]
    %v89 = vld [vmem:[%s1 + $0x28] sm:$0xff]
    %v90 = vld [vmem:[%s1 + $0x30] sm:$0xff]
    %v91 = vld [vmem:[%s1 + $0x38] sm:$0xff]
    %v92 = vld [vmem:[%s1 + $0x40] sm:$0xff]
    %v93 = vld [vmem:[%s1 + $0x48] sm:$0xff]
    %v94 = vld [vmem:[%s1 + $0x50] sm:$0xff]
    %v95 = vld [vmem:[%s1 + $0x58] sm:$0xff]
    %v96 = vld [vmem:[%s1 + $0x60] sm:$0xff]
    %v97 = vld [vmem:[%s1 + $0x68] sm:$0xff]
    %v98 = vld [vmem:[%s1 + $0x70] sm:$0xff]
    %v99 = vld [vmem:[%s1 + $0x78] sm:$0xff]
    %v100 = vld [vmem:[%s1 + $0x80] sm:$0xff]
    %v101 = vld [vmem:[%s1 + $0x88] sm:$0xff]
    %v102 = vld [vmem:[%s1 + $0x90] sm:$0xff]
    %v103 = vld [vmem:[%s1 + $0x98] sm:$0xff]
    %v104 = vld [vmem:[%s1 + $0xa0] sm:$0xff]
    %v105 = vld [vmem:[%s1 + $0xa8] sm:$0xff]
    %v106 = vld [vmem:[%s1 + $0xb0] sm:$0xff]
    %v107 = vld [vmem:[%s1 + $0xb8] sm:$0xff]
    %v108 = vld [vmem:[%s1 + $0xc0] sm:$0xff]
    %v109 = vld [vmem:[%s1 + $0xc8] sm:$0xff]
    %v110 = vld [vmem:[%s1 + $0xd0] sm:$0xff]
    %v111 = vld [vmem:[%s1 + $0xd8] sm:$0xff]
    %v112 = vld [vmem:[%s1 + $0xe0] sm:$0xff]
    %v113 = vld [vmem:[%s1 + $0xe8] sm:$0xff]
    %v114 = vld [vmem:[%s1 + $0xf0] sm:$0xff]
    %v115 = vld [vmem:[%s1 + $0xf8] sm:$0xff]
    %v116 = vld [vmem:[%s1 + $0x100] sm:$0xff]
    %v117 = vld [vmem:[%s1 + $0x108] sm:$0xff]
    %v118 = vld [vmem:[%s1 + $0x110] sm:$0xff]
    %v119 = vld [vmem:[%s1 + $0x118] sm:$0xff]
    %v120 = vld [vmem:[%s1 + $0x120] sm:$0xff]
    %v121 = vld [vmem:[%s1 + $0x128] sm:$0xff]
    %v122 = vld [vmem:[%s1 + $0x130] sm:$0xff]
    %v123 = vld [vmem:[%s1 + $0x138] sm:$0xff]
    %v124 = vld [vmem:[%s1 + $0x140] sm:$0xff]
    %v125 = vld [vmem:[%s1 + $0x148] sm:$0xff]
    %v126 = vld [vmem:[%s1 + $0x150] sm:$0xff]
    %v127 = vld [vmem:[%s1 + $0x158] sm:$0xff]
    %v128 = vld [vmem:[%s1 + $0x160] sm:$0xff]
    %v129 = vld [vmem:[%s1 + $0x168] sm:$0xff]
    %v130 = vld [vmem:[%s1 + $0x170] sm:$0xff]
    %v131 = vld [vmem:[%s1 + $0x178] sm:$0xff]
    %v132 = vld [vmem:[%s1 + $0x180] sm:$0xff]
    %v133 = vld [vmem:[%s1 + $0x188] sm:$0xff]
    %v134 = vld [vmem:[%s1 + $0x190] sm:$0xff]
    %v135 = vld [vmem:[%s1 + $0x198] sm:$0xff]
    %v136 = vld [vmem:[%s1 + $0x1a0] sm:$0xff]
    %v137 = vld [vmem:[%s1 + $0x1a8] sm:$0xff]
    %v138 = vld [vmem:[%s1 + $0x1b0] sm:$0xff]
    %v139 = vld [vmem:[%s1 + $0x1b8] sm:$0xff]
    %v140 = vld [vmem:[%s1 + $0x1c0] sm:$0xff]
    %v141 = vld [vmem:[%s1 + $0x1c8] sm:$0xff]
    %v142 = vld [vmem:[%s1 + $0x1d0] sm:$0xff]
    %v143 = vld [vmem:[%s1 + $0x1d8] sm:$0xff]
    %v144 = vld [vmem:[%s1 + $0x1e0] sm:$0xff]
    %v145 = vld [vmem:[%s1 + $0x1e8] sm:$0xff]
    %v146 = vld [vmem:[%s1 + $0x1f0] sm:$0xff]
    %v147 = vld [vmem:[%s1 + $0x1f8] sm:$0xff]
    %v148 = vld [vmem:[%s1 + $0x200] sm:$0xff]
    %v149 = vld [vmem:[%s1 + $0x208] sm:$0xff]
    %v150 = vld [vmem:[%s1 + $0x210] sm:$0xff]
    %v151 = vld [vmem:[%s1 + $0x218] sm:$0xff]
    %v152 = vld [vmem:[%s1 + $0x220] sm:$0xff]
    %v153 = vld [vmem:[%s1 + $0x228] sm:$0xff]
    %v154 = vld [vmem:[%s1 + $0x230] sm:$0xff]
    %v155 = vld [vmem:[%s1 + $0x238] sm:$0xff]
    %v156 = vld [vmem:[%s1 + $0x240] sm:$0xff]
    %v157 = vld [vmem:[%s1 + $0x248] sm:$0xff]
    %v158 = vld [vmem:[%s1 + $0x250] sm:$0xff]
    %v159 = vld [vmem:[%s1 + $0x258] sm:$0xff]
    %v160 = vld [vmem:[%s1 + $0x260] sm:$0xff]
    %v161 = vld [vmem:[%s1 + $0x268] sm:$0xff]
    %v162 = vld [vmem:[%s1 + $0x270] sm:$0xff]
    %v163 = vld [vmem:[%s1 + $0x278] sm:$0xff]
    %v164 = vld [vmem:[%s1 + $0x280] sm:$0xff]
    %v165 = vld [vmem:[%s1 + $0x288] sm:$0xff]
    %v166 = vld [vmem:[%s1 + $0x290] sm:$0xff]
    %v167 = vld [vmem:[%s1 + $0x298] sm:$0xff]
    %v168 = vld [vmem:[%s1 + $0x2a0] sm:$0xff]
    %v169 = vld [vmem:[%s1 + $0x2a8] sm:$0xff]
    %v170 = vld [vmem:[%s1 + $0x2b0] sm:$0xff]
    %v171 = vld [vmem:[%s1 + $0x2b8] sm:$0xff]
    %v172 = vld [vmem:[%s1 + $0x2c0] sm:$0xff]
    %v173 = vld [vmem:[%s1 + $0x2c8] sm:$0xff]
    %v174 = vld [vmem:[%s1 + $0x2d0] sm:$0xff]
    %v175 = vld [vmem:[%s1 + $0x2d8] sm:$0xff]
    %v176 = vld [vmem:[%s1 + $0x2e0] sm:$0xff]
    %v177 = vld [vmem:[%s1 + $0x2e8] sm:$0xff]
    %v178 = vld [vmem:[%s1 + $0x2f0] sm:$0xff]
    %v179 = vld [vmem:[%s1 + $0x2f8] sm:$0xff]
    %v180 = vld [vmem:[%s2] sm:$0x3]
    %v182 = vlaneseq
    %v183 = vshrl.u32 %v182, 7
    %v184 = vsub.s32 0, %v183
    %v185 = vrot.slane %v180, %v184
    %v186 = vlaneseq
    %v187 = vshrl.u32 %v186, 7
    %v188 = vsub.s32 1, %v187
    %v189 = vrot.slane %v180, %v188
    %192 = vmatprep.subr.mxu0 %v115
    %193 = vmatpush1.msra.mxu0 %v114
    %194 = vmatprep.subr.mxu0 %v113
    %195 = vmatpush1.msra.mxu0 %v112
    %196 = vmatprep.subr.mxu0 %v111
    %197 = vmatpush1.msra.mxu0 %v110
    %198 = vmatprep.subr.mxu0 %v109
    %199 = vmatpush1.msra.mxu0 %v108
    %200 = vmatprep.subr.mxu0 %v107
    %201 = vmatpush1.msra.mxu0 %v106
    %202 = vmatprep.subr.mxu0 %v105
    %203 = vmatpush1.msra.mxu0 %v104
    %204 = vmatprep.subr.mxu0 %v103
    %205 = vmatpush1.msra.mxu0 %v102
    %206 = vmatprep.subr.mxu0 %v101
    %207 = vmatpush1.msra.mxu0 %v100
    %208 = vmatprep.subr.mxu0 %v99
    %209 = vmatpush1.msra.mxu0 %v98
    %210 = vmatprep.subr.mxu0 %v97
    %211 = vmatpush1.msra.mxu0 %v96
    %212 = vmatprep.subr.mxu0 %v95
    %213 = vmatpush1.msra.mxu0 %v94
    %214 = vmatprep.subr.mxu0 %v93
    %215 = vmatpush1.msra.mxu0 %v92
    %216 = vmatprep.subr.mxu0 %v91
    %217 = vmatpush1.msra.mxu0 %v90
    %218 = vmatprep.subr.mxu0 %v89
    %219 = vmatpush1.msra.mxu0 %v88
    %220 = vmatprep.subr.mxu0 %v87
    %221 = vmatpush1.msra.mxu0 %v86
    %222 = vmatprep.subr.mxu0 %v85
    %223 = vmatpush1.msra.mxu0 %v84
    %224 = vmatprep.subr.mxu0 %v147
    %225 = vmatpush2.msra.mxu0 %v146
    %226 = vmatprep.subr.mxu0 %v145
    %227 = vmatpush2.msra.mxu0 %v144
    %228 = vmatprep.subr.mxu0 %v143
    %229 = vmatpush2.msra.mxu0 %v142
    %230 = vmatprep.subr.mxu0 %v141
    %231 = vmatpush2.msra.mxu0 %v140
    %232 = vmatprep.subr.mxu0 %v139
    %233 = vmatpush2.msra.mxu0 %v138
    %234 = vmatprep.subr.mxu0 %v137
    %235 = vmatpush2.msra.mxu0 %v136
    %236 = vmatprep.subr.mxu0 %v135
    %237 = vmatpush2.msra.mxu0 %v134
    %238 = vmatprep.subr.mxu0 %v133
    %239 = vmatpush2.msra.mxu0 %v132
    %240 = vmatprep.subr.mxu0 %v131
    %241 = vmatpush2.msra.mxu0 %v130
    %242 = vmatprep.subr.mxu0 %v129
    %243 = vmatpush2.msra.mxu0 %v128
    %244 = vmatprep.subr.mxu0 %v127
    %245 = vmatpush2.msra.mxu0 %v126
    %246 = vmatprep.subr.mxu0 %v125
    %247 = vmatpush2.msra.mxu0 %v124
    %248 = vmatprep.subr.mxu0 %v123
    %249 = vmatpush2.msra.mxu0 %v122
    %250 = vmatprep.subr.mxu0 %v121
    %251 = vmatpush2.msra.mxu0 %v120
    %252 = vmatprep.subr.mxu0 %v119
    %253 = vmatpush2.msra.mxu0 %v118
    %254 = vmatprep.subr.mxu0 %v117
    %255 = vmatpush2.msra.mxu0 %v116
    %256 = vmatprep.mubr.f32.mxu0 %v82
    %257 = vmatmul.mubr.f32.gmra.mxu0 %v81
    %v258 = vpop.f32.mrf.mxu0
    %v259 = vadd.f32 %v185, %v258
    %v260 = vpop.f32.mrf.mxu0
    %v261 = vadd.f32 %v189, %v260
    %262 = vdwg.mxu0
    %263 = vmatprep.subr.mxu0 %v179
    %264 = vmatpush1.msra.mxu0 %v178
    %265 = vmatprep.subr.mxu0 %v177
    %266 = vmatpush1.msra.mxu0 %v176
    %267 = vmatprep.subr.mxu0 %v175
    %268 = vmatpush1.msra.mxu0 %v174
    %269 = vmatprep.subr.mxu0 %v173
    %270 = vmatpush1.msra.mxu0 %v172
    %271 = vmatprep.subr.mxu0 %v171
    %272 = vmatpush1.msra.mxu0 %v170
    %273 = vmatprep.subr.mxu0 %v169
    %274 = vmatpush1.msra.mxu0 %v168
    %275 = vmatprep.subr.mxu0 %v167
    %276 = vmatpush1.msra.mxu0 %v166
    %277 = vmatprep.subr.mxu0 %v165
    %278 = vmatpush1.msra.mxu0 %v164
    %279 = vmatprep.subr.mxu0 %v163
    %280 = vmatpush1.msra.mxu0 %v162
    %281 = vmatprep.subr.mxu0 %v161
    %282 = vmatpush1.msra.mxu0 %v160
    %283 = vmatprep.subr.mxu0 %v159
    %284 = vmatpush1.msra.mxu0 %v158
    %285 = vmatprep.subr.mxu0 %v157
    %286 = vmatpush1.msra.mxu0 %v156
    %287 = vmatprep.subr.mxu0 %v155
    %288 = vmatpush1.msra.mxu0 %v154
    %289 = vmatprep.subr.mxu0 %v153
    %290 = vmatpush1.msra.mxu0 %v152
    %291 = vmatprep.subr.mxu0 %v151
    %292 = vmatpush1.msra.mxu0 %v150
    %293 = vmatprep.subr.mxu0 %v149
    %294 = vmatpush1.msra.mxu0 %v148
    %295 = vmatprep.subr.mxu0 0.0
    %296 = vmatpush2.msra.mxu0 0.0
    %297 = vmatprep.subr.mxu0 0.0
    %298 = vmatpush2.msra.mxu0 0.0
    %299 = vmatprep.subr.mxu0 0.0
    %300 = vmatpush2.msra.mxu0 0.0
    %301 = vmatprep.subr.mxu0 0.0
    %302 = vmatpush2.msra.mxu0 0.0
    %303 = vmatprep.subr.mxu0 0.0
    %304 = vmatpush2.msra.mxu0 0.0
    %305 = vmatprep.subr.mxu0 0.0
    %306 = vmatpush2.msra.mxu0 0.0
    %307 = vmatprep.subr.mxu0 0.0
    %308 = vmatpush2.msra.mxu0 0.0
    %309 = vmatprep.subr.mxu0 0.0
    %310 = vmatpush2.msra.mxu0 0.0
    %311 = vmatprep.subr.mxu0 0.0
    %312 = vmatpush2.msra.mxu0 0.0
    %313 = vmatprep.subr.mxu0 0.0
    %314 = vmatpush2.msra.mxu0 0.0
    %315 = vmatprep.subr.mxu0 0.0
    %316 = vmatpush2.msra.mxu0 0.0
    %317 = vmatprep.subr.mxu0 0.0
    %318 = vmatpush2.msra.mxu0 0.0
    %319 = vmatprep.subr.mxu0 0.0
    %320 = vmatpush2.msra.mxu0 0.0
    %321 = vmatprep.subr.mxu0 0.0
    %322 = vmatpush2.msra.mxu0 0.0
    %323 = vmatprep.subr.mxu0 0.0
    %324 = vmatpush2.msra.mxu0 0.0
    %325 = vmatprep.subr.mxu0 0.0
    %326 = vmatpush2.msra.mxu0 0.0
    %327 = vmatprep.mubr.f32.mxu0 0.0
    %328 = vmatmul.mubr.f32.gmra.mxu0 %v83
    %v329 = vpop.f32.mrf.mxu0
    %v330 = vadd.f32 %v259, %v329
    %v331 = vpop.f32.mrf.mxu0
    %v332 = vadd.f32 %v261, %v331
    %333 = vdwg.mxu0
    %v334 = vmax.f32 %v330, 0.0
    %v335 = vmax.f32 %v332, 0.0
    %v336 = vld [vmem:[%s3] sm:$0xff]
    %v337 = vld [vmem:[%s3 + $0x8] sm:$0xff]
    %v338 = vld [vmem:[%s3 + $0x10] sm:$0xff]
    %v339 = vld [vmem:[%s3 + $0x18] sm:$0xff]
    %v340 = vld [vmem:[%s3 + $0x20] sm:$0xff]
    %v341 = vld [vmem:[%s3 + $0x28] sm:$0xff]
    %v342 = vld [vmem:[%s3 + $0x30] sm:$0xff]
    %v343 = vld [vmem:[%s3 + $0x38] sm:$0xff]
    %v344 = vld [vmem:[%s3 + $0x40] sm:$0xff]
    %v345 = vld [vmem:[%s3 + $0x48] sm:$0xff]
    %v346 = vld [vmem:[%s3 + $0x50] sm:$0xff]
    %v347 = vld [vmem:[%s3 + $0x58] sm:$0xff]
    %v348 = vld [vmem:[%s3 + $0x60] sm:$0xff]
    %v349 = vld [vmem:[%s3 + $0x68] sm:$0xff]
    %v350 = vld [vmem:[%s3 + $0x70] sm:$0xff]
    %v351 = vld [vmem:[%s3 + $0x78] sm:$0xff]
    %v352 = vld [vmem:[%s3 + $0x80] sm:$0xff]
    %v353 = vld [vmem:[%s3 + $0x88] sm:$0xff]
    %v354 = vld [vmem:[%s3 + $0x90] sm:$0xff]
    %v355 = vld [vmem:[%s3 + $0x98] sm:$0xff]
    %v356 = vld [vmem:[%s3 + $0xa0] sm:$0xff]
    %v357 = vld [vmem:[%s3 + $0xa8] sm:$0xff]
    %v358 = vld [vmem:[%s3 + $0xb0] sm:$0xff]
    %v359 = vld [vmem:[%s3 + $0xb8] sm:$0xff]
    %v360 = vld [vmem:[%s3 + $0xc0] sm:$0xff]
    %v361 = vld [vmem:[%s3 + $0xc8] sm:$0xff]
    %v362 = vld [vmem:[%s3 + $0xd0] sm:$0xff]
    %v363 = vld [vmem:[%s3 + $0xd8] sm:$0xff]
    %v364 = vld [vmem:[%s3 + $0xe0] sm:$0xff]
    %v365 = vld [vmem:[%s3 + $0xe8] sm:$0xff]
    %v366 = vld [vmem:[%s3 + $0xf0] sm:$0xff]
    %v367 = vld [vmem:[%s3 + $0xf8] sm:$0xff]
    %v368 = vld [vmem:[%s4] sm:$0x1]
    %v370 = vlaneseq
    %v371 = vshrl.u32 %v370, 7
    %v372 = vsub.s32 0, %v371
    %v373 = vrot.slane %v368, %v372
    %375 = vmatprep.subr.mxu0 0.0
    %376 = vmatpush1.msra.mxu0 %v351
    %377 = vmatprep.subr.mxu0 0.0
    %378 = vmatpush1.msra.mxu0 %v350
    %379 = vmatprep.subr.mxu0 0.0
    %380 = vmatpush1.msra.mxu0 %v349
    %381 = vmatprep.subr.mxu0 0.0
    %382 = vmatpush1.msra.mxu0 %v348
    %383 = vmatprep.subr.mxu0 0.0
    %384 = vmatpush1.msra.mxu0 %v347
    %385 = vmatprep.subr.mxu0 0.0
    %386 = vmatpush1.msra.mxu0 %v346
    %387 = vmatprep.subr.mxu0 0.0
    %388 = vmatpush1.msra.mxu0 %v345
    %389 = vmatprep.subr.mxu0 0.0
    %390 = vmatpush1.msra.mxu0 %v344
    %391 = vmatprep.subr.mxu0 0.0
    %392 = vmatpush1.msra.mxu0 %v343
    %393 = vmatprep.subr.mxu0 0.0
    %394 = vmatpush1.msra.mxu0 %v342
    %395 = vmatprep.subr.mxu0 0.0
    %396 = vmatpush1.msra.mxu0 %v341
    %397 = vmatprep.subr.mxu0 0.0
    %398 = vmatpush1.msra.mxu0 %v340
    %399 = vmatprep.subr.mxu0 0.0
    %400 = vmatpush1.msra.mxu0 %v339
    %401 = vmatprep.subr.mxu0 0.0
    %402 = vmatpush1.msra.mxu0 %v338
    %403 = vmatprep.subr.mxu0 0.0
    %404 = vmatpush1.msra.mxu0 %v337
    %405 = vmatprep.subr.mxu0 0.0
    %406 = vmatpush1.msra.mxu0 %v336
    %407 = vmatprep.subr.mxu0 0.0
    %408 = vmatpush2.msra.mxu0 %v367
    %409 = vmatprep.subr.mxu0 0.0
    %410 = vmatpush2.msra.mxu0 %v366
    %411 = vmatprep.subr.mxu0 0.0
    %412 = vmatpush2.msra.mxu0 %v365
    %413 = vmatprep.subr.mxu0 0.0
    %414 = vmatpush2.msra.mxu0 %v364
    %415 = vmatprep.subr.mxu0 0.0
    %416 = vmatpush2.msra.mxu0 %v363
    %417 = vmatprep.subr.mxu0 0.0
    %418 = vmatpush2.msra.mxu0 %v362
    %419 = vmatprep.subr.mxu0 0.0
    %420 = vmatpush2.msra.mxu0 %v361
    %421 = vmatprep.subr.mxu0 0.0
    %422 = vmatpush2.msra.mxu0 %v360
    %423 = vmatprep.subr.mxu0 0.0
    %424 = vmatpush2.msra.mxu0 %v359
    %425 = vmatprep.subr.mxu0 0.0
    %426 = vmatpush2.msra.mxu0 %v358
    %427 = vmatprep.subr.mxu0 0.0
    %428 = vmatpush2.msra.mxu0 %v357
    %429 = vmatprep.subr.mxu0 0.0
    %430 = vmatpush2.msra.mxu0 %v356
    %431 = vmatprep.subr.mxu0 0.0
    %432 = vmatpush2.msra.mxu0 %v355
    %433 = vmatprep.subr.mxu0 0.0
    %434 = vmatpush2.msra.mxu0 %v354
    %435 = vmatprep.subr.mxu0 0.0
    %436 = vmatpush2.msra.mxu0 %v353
    %437 = vmatprep.subr.mxu0 0.0
    %438 = vmatpush2.msra.mxu0 %v352
    %439 = vmatprep.mubr.f32.mxu0 %v335
    %440 = vmatmul.mubr.f32.gmra.mxu0 %v334
    %v441 = vpop.f32.mrf.mxu0
    %v442 = vadd.f32 %v373, %v441
    %v443 = vpop.f32.mrf.mxu0
    %444 = vdwg.mxu0
    %v445 = vmax.f32 %v442, 0.0
    %v446 = vld [vmem:[%s5] sm:$0xff]
    %v447 = vld [vmem:[%s5 + $0x8] sm:$0xff]
    %v448 = vld [vmem:[%s5 + $0x10] sm:$0xff]
    %v449 = vld [vmem:[%s5 + $0x18] sm:$0xff]
    %v450 = vld [vmem:[%s5 + $0x20] sm:$0xff]
    %v451 = vld [vmem:[%s5 + $0x28] sm:$0xff]
    %v452 = vld [vmem:[%s5 + $0x30] sm:$0xff]
    %v453 = vld [vmem:[%s5 + $0x38] sm:$0xff]
    %v454 = vld [vmem:[%s5 + $0x40] sm:$0xff]
    %v455 = vld [vmem:[%s5 + $0x48] sm:$0xff]
    %v456 = vld [vmem:[%s5 + $0x50] sm:$0xff]
    %v457 = vld [vmem:[%s5 + $0x58] sm:$0xff]
    %v458 = vld [vmem:[%s5 + $0x60] sm:$0xff]
    %v459 = vld [vmem:[%s5 + $0x68] sm:$0xff]
    %v460 = vld [vmem:[%s5 + $0x70] sm:$0xff]
    %v461 = vld [vmem:[%s5 + $0x78] sm:$0xff]
    %v462 = vld [vmem:[%s6] sm:$0x1]
    %v464 = vlaneseq
    %v465 = vshrl.u32 %v464, 7
    %v466 = vsub.s32 0, %v465
    %v467 = vrot.slane %v462, %v466
    %469 = vmatprep.subr.mxu0 0.0
    %470 = vmatpush1.msra.mxu0 %v461
    %471 = vmatprep.subr.mxu0 0.0
    %472 = vmatpush1.msra.mxu0 %v460
    %473 = vmatprep.subr.mxu0 0.0
    %474 = vmatpush1.msra.mxu0 %v459
    %475 = vmatprep.subr.mxu0 0.0
    %476 = vmatpush1.msra.mxu0 %v458
    %477 = vmatprep.subr.mxu0 0.0
    %478 = vmatpush1.msra.mxu0 %v457
    %479 = vmatprep.subr.mxu0 0.0
    %480 = vmatpush1.msra.mxu0 %v456
    %481 = vmatprep.subr.mxu0 0.0
    %482 = vmatpush1.msra.mxu0 %v455
    %483 = vmatprep.subr.mxu0 0.0
    %484 = vmatpush1.msra.mxu0 %v454
    %485 = vmatprep.subr.mxu0 0.0
    %486 = vmatpush1.msra.mxu0 %v453
    %487 = vmatprep.subr.mxu0 0.0
    %488 = vmatpush1.msra.mxu0 %v452
    %489 = vmatprep.subr.mxu0 0.0
    %490 = vmatpush1.msra.mxu0 %v451
    %491 = vmatprep.subr.mxu0 0.0
    %492 = vmatpush1.msra.mxu0 %v450
    %493 = vmatprep.subr.mxu0 0.0
    %494 = vmatpush1.msra.mxu0 %v449
    %495 = vmatprep.subr.mxu0 0.0
    %496 = vmatpush1.msra.mxu0 %v448
    %497 = vmatprep.subr.mxu0 0.0
    %498 = vmatpush1.msra.mxu0 %v447
    %499 = vmatprep.subr.mxu0 0.0
    %500 = vmatpush1.msra.mxu0 %v446
    %501 = vmatprep.subr.mxu0 0.0
    %502 = vmatpush2.msra.mxu0 0.0
    %503 = vmatprep.subr.mxu0 0.0
    %504 = vmatpush2.msra.mxu0 0.0
    %505 = vmatprep.subr.mxu0 0.0
    %506 = vmatpush2.msra.mxu0 0.0
    %507 = vmatprep.subr.mxu0 0.0
    %508 = vmatpush2.msra.mxu0 0.0
    %509 = vmatprep.subr.mxu0 0.0
    %510 = vmatpush2.msra.mxu0 0.0
    %511 = vmatprep.subr.mxu0 0.0
    %512 = vmatpush2.msra.mxu0 0.0
    %513 = vmatprep.subr.mxu0 0.0
    %514 = vmatpush2.msra.mxu0 0.0
    %515 = vmatprep.subr.mxu0 0.0
    %516 = vmatpush2.msra.mxu0 0.0
    %517 = vmatprep.subr.mxu0 0.0
    %518 = vmatpush2.msra.mxu0 0.0
    %519 = vmatprep.subr.mxu0 0.0
    %520 = vmatpush2.msra.mxu0 0.0
    %521 = vmatprep.subr.mxu0 0.0
    %522 = vmatpush2.msra.mxu0 0.0
    %523 = vmatprep.subr.mxu0 0.0
    %524 = vmatpush2.msra.mxu0 0.0
    %525 = vmatprep.subr.mxu0 0.0
    %526 = vmatpush2.msra.mxu0 0.0
    %527 = vmatprep.subr.mxu0 0.0
    %528 = vmatpush2.msra.mxu0 0.0
    %529 = vmatprep.subr.mxu0 0.0
    %530 = vmatpush2.msra.mxu0 0.0
    %531 = vmatprep.subr.mxu0 0.0
    %532 = vmatpush2.msra.mxu0 0.0
    %533 = vmatprep.mubr.f32.mxu0 0.0
    %534 = vmatmul.mubr.f32.gmra.mxu0 %v445
    %v535 = vpop.f32.mrf.mxu0
    %v536 = vadd.f32 %v467, %v535
    %v537 = vpop.f32.mrf.mxu0
    %538 = vdwg.mxu0
    %v539 = vmax.f32 %v536, 0.0
    %v540 = vld [vmem:[%s7] sm:$0xff]
    %v541 = vld [vmem:[%s7 + $0x8] sm:$0xff]
    %v542 = vld [vmem:[%s7 + $0x10] sm:$0xff]
    %v543 = vld [vmem:[%s7 + $0x18] sm:$0xff]
    %v544 = vld [vmem:[%s7 + $0x20] sm:$0xff]
    %v545 = vld [vmem:[%s7 + $0x28] sm:$0xff]
    %v546 = vld [vmem:[%s7 + $0x30] sm:$0xff]
    %v547 = vld [vmem:[%s7 + $0x38] sm:$0xff]
    %v548 = vld [vmem:[%s7 + $0x40] sm:$0xff]
    %v549 = vld [vmem:[%s7 + $0x48] sm:$0xff]
    %v550 = vld [vmem:[%s7 + $0x50] sm:$0xff]
    %v551 = vld [vmem:[%s7 + $0x58] sm:$0xff]
    %v552 = vld [vmem:[%s7 + $0x60] sm:$0xff]
    %v553 = vld [vmem:[%s7 + $0x68] sm:$0xff]
    %v554 = vld [vmem:[%s7 + $0x70] sm:$0xff]
    %v555 = vld [vmem:[%s7 + $0x78] sm:$0xff]
    %v556 = vld [vmem:[%s8] sm:$0x1]
    %v558 = vlaneseq
    %v559 = vshrl.u32 %v558, 7
    %v560 = vsub.s32 0, %v559
    %v561 = vrot.slane %v556, %v560
    %563 = vmatprep.subr.mxu0 0.0
    %564 = vmatpush1.msra.mxu0 %v555
    %565 = vmatprep.subr.mxu0 0.0
    %566 = vmatpush1.msra.mxu0 %v554
    %567 = vmatprep.subr.mxu0 0.0
    %568 = vmatpush1.msra.mxu0 %v553
    %569 = vmatprep.subr.mxu0 0.0
    %570 = vmatpush1.msra.mxu0 %v552
    %571 = vmatprep.subr.mxu0 0.0
    %572 = vmatpush1.msra.mxu0 %v551
    %573 = vmatprep.subr.mxu0 0.0
    %574 = vmatpush1.msra.mxu0 %v550
    %575 = vmatprep.subr.mxu0 0.0
    %576 = vmatpush1.msra.mxu0 %v549
    %577 = vmatprep.subr.mxu0 0.0
    %578 = vmatpush1.msra.mxu0 %v548
    %579 = vmatprep.subr.mxu0 0.0
    %580 = vmatpush1.msra.mxu0 %v547
    %581 = vmatprep.subr.mxu0 0.0
    %582 = vmatpush1.msra.mxu0 %v546
    %583 = vmatprep.subr.mxu0 0.0
    %584 = vmatpush1.msra.mxu0 %v545
    %585 = vmatprep.subr.mxu0 0.0
    %586 = vmatpush1.msra.mxu0 %v544
    %587 = vmatprep.subr.mxu0 0.0
    %588 = vmatpush1.msra.mxu0 %v543
    %589 = vmatprep.subr.mxu0 0.0
    %590 = vmatpush1.msra.mxu0 %v542
    %591 = vmatprep.subr.mxu0 0.0
    %592 = vmatpush1.msra.mxu0 %v541
    %593 = vmatprep.subr.mxu0 0.0
    %594 = vmatpush1.msra.mxu0 %v540
    %595 = vmatprep.subr.mxu0 0.0
    %596 = vmatpush2.msra.mxu0 0.0
    %597 = vmatprep.subr.mxu0 0.0
    %598 = vmatpush2.msra.mxu0 0.0
    %599 = vmatprep.subr.mxu0 0.0
    %600 = vmatpush2.msra.mxu0 0.0
    %601 = vmatprep.subr.mxu0 0.0
    %602 = vmatpush2.msra.mxu0 0.0
    %603 = vmatprep.subr.mxu0 0.0
    %604 = vmatpush2.msra.mxu0 0.0
    %605 = vmatprep.subr.mxu0 0.0
    %606 = vmatpush2.msra.mxu0 0.0
    %607 = vmatprep.subr.mxu0 0.0
    %608 = vmatpush2.msra.mxu0 0.0
    %609 = vmatprep.subr.mxu0 0.0
    %610 = vmatpush2.msra.mxu0 0.0
    %611 = vmatprep.subr.mxu0 0.0
    %612 = vmatpush2.msra.mxu0 0.0
    %613 = vmatprep.subr.mxu0 0.0
    %614 = vmatpush2.msra.mxu0 0.0
    %615 = vmatprep.subr.mxu0 0.0
    %616 = vmatpush2.msra.mxu0 0.0
    %617 = vmatprep.subr.mxu0 0.0
    %618 = vmatpush2.msra.mxu0 0.0
    %619 = vmatprep.subr.mxu0 0.0
    %620 = vmatpush2.msra.mxu0 0.0
    %621 = vmatprep.subr.mxu0 0.0
    %622 = vmatpush2.msra.mxu0 0.0
    %623 = vmatprep.subr.mxu0 0.0
    %624 = vmatpush2.msra.mxu0 0.0
    %625 = vmatprep.subr.mxu0 0.0
    %626 = vmatpush2.msra.mxu0 0.0
    %627 = vmatprep.mubr.f32.mxu0 0.0
    %628 = vmatmul.mubr.f32.gmra.mxu0 %v539
    %v629 = vpop.f32.mrf.mxu0
    %v630 = vadd.f32 %v561, %v629
    %v631 = vpop.f32.mrf.mxu0
    %632 = vdwg.mxu0
    %v633 = vmax.f32 %v630, 0.0
    %v634 = vld [vmem:[%s9] sm:$0xff]
    %v635 = vld [vmem:[%s9 + $0x8] sm:$0xff]
    %v636 = vld [vmem:[%s9 + $0x10] sm:$0xff]
    %v637 = vld [vmem:[%s9 + $0x18] sm:$0xff]
    %v638 = vld [vmem:[%s9 + $0x20] sm:$0xff]
    %v639 = vld [vmem:[%s9 + $0x28] sm:$0xff]
    %v640 = vld [vmem:[%s9 + $0x30] sm:$0xff]
    %v641 = vld [vmem:[%s9 + $0x38] sm:$0xff]
    %v642 = vld [vmem:[%s9 + $0x40] sm:$0xff]
    %v643 = vld [vmem:[%s9 + $0x48] sm:$0xff]
    %v644 = vld [vmem:[%s9 + $0x50] sm:$0xff]
    %v645 = vld [vmem:[%s9 + $0x58] sm:$0xff]
    %v646 = vld [vmem:[%s9 + $0x60] sm:$0xff]
    %v647 = vld [vmem:[%s9 + $0x68] sm:$0xff]
    %v648 = vld [vmem:[%s9 + $0x70] sm:$0xff]
    %v649 = vld [vmem:[%s9 + $0x78] sm:$0xff]
    %v650 = vld [vmem:[%s10] sm:$0x1]
    %v652 = vlaneseq
    %v653 = vshrl.u32 %v652, 7
    %v654 = vsub.s32 0, %v653
    %v655 = vrot.slane %v650, %v654
    %657 = vmatprep.subr.mxu0 0.0
    %658 = vmatpush1.msra.mxu0 %v649
    %659 = vmatprep.subr.mxu0 0.0
    %660 = vmatpush1.msra.mxu0 %v648
    %661 = vmatprep.subr.mxu0 0.0
    %662 = vmatpush1.msra.mxu0 %v647
    %663 = vmatprep.subr.mxu0 0.0
    %664 = vmatpush1.msra.mxu0 %v646
    %665 = vmatprep.subr.mxu0 0.0
    %666 = vmatpush1.msra.mxu0 %v645
    %667 = vmatprep.subr.mxu0 0.0
    %668 = vmatpush1.msra.mxu0 %v644
    %669 = vmatprep.subr.mxu0 0.0
    %670 = vmatpush1.msra.mxu0 %v643
    %671 = vmatprep.subr.mxu0 0.0
    %672 = vmatpush1.msra.mxu0 %v642
    %673 = vmatprep.subr.mxu0 0.0
    %674 = vmatpush1.msra.mxu0 %v641
    %675 = vmatprep.subr.mxu0 0.0
    %676 = vmatpush1.msra.mxu0 %v640
    %677 = vmatprep.subr.mxu0 0.0
    %678 = vmatpush1.msra.mxu0 %v639
    %679 = vmatprep.subr.mxu0 0.0
    %680 = vmatpush1.msra.mxu0 %v638
    %681 = vmatprep.subr.mxu0 0.0
    %682 = vmatpush1.msra.mxu0 %v637
    %683 = vmatprep.subr.mxu0 0.0
    %684 = vmatpush1.msra.mxu0 %v636
    %685 = vmatprep.subr.mxu0 0.0
    %686 = vmatpush1.msra.mxu0 %v635
    %687 = vmatprep.subr.mxu0 0.0
    %688 = vmatpush1.msra.mxu0 %v634
    %689 = vmatprep.subr.mxu0 0.0
    %690 = vmatpush2.msra.mxu0 0.0
    %691 = vmatprep.subr.mxu0 0.0
    %692 = vmatpush2.msra.mxu0 0.0
    %693 = vmatprep.subr.mxu0 0.0
    %694 = vmatpush2.msra.mxu0 0.0
    %695 = vmatprep.subr.mxu0 0.0
    %696 = vmatpush2.msra.mxu0 0.0
    %697 = vmatprep.subr.mxu0 0.0
    %698 = vmatpush2.msra.mxu0 0.0
    %699 = vmatprep.subr.mxu0 0.0
    %700 = vmatpush2.msra.mxu0 0.0
    %701 = vmatprep.subr.mxu0 0.0
    %702 = vmatpush2.msra.mxu0 0.0
    %703 = vmatprep.subr.mxu0 0.0
    %704 = vmatpush2.msra.mxu0 0.0
    %705 = vmatprep.subr.mxu0 0.0
    %706 = vmatpush2.msra.mxu0 0.0
    %707 = vmatprep.subr.mxu0 0.0
    %708 = vmatpush2.msra.mxu0 0.0
    %709 = vmatprep.subr.mxu0 0.0
    %710 = vmatpush2.msra.mxu0 0.0
    %711 = vmatprep.subr.mxu0 0.0
    %712 = vmatpush2.msra.mxu0 0.0
    %713 = vmatprep.subr.mxu0 0.0
    %714 = vmatpush2.msra.mxu0 0.0
    %715 = vmatprep.subr.mxu0 0.0
    %716 = vmatpush2.msra.mxu0 0.0
    %717 = vmatprep.subr.mxu0 0.0
    %718 = vmatpush2.msra.mxu0 0.0
    %719 = vmatprep.subr.mxu0 0.0
    %720 = vmatpush2.msra.mxu0 0.0
    %721 = vmatprep.mubr.f32.mxu0 0.0
    %722 = vmatmul.mubr.f32.gmra.mxu0 %v633
    %v723 = vpop.f32.mrf.mxu0
    %v724 = vadd.f32 %v655, %v723
    %v725 = vpop.f32.mrf.mxu0
    %726 = vdwg.mxu0
    %v727 = vmax.f32 %v724, 0.0
    %v728 = vld [vmem:[%s11] sm:$0xff]
    %v729 = vld [vmem:[%s11 + $0x8] sm:$0xff]
    %v730 = vld [vmem:[%s11 + $0x10] sm:$0xff]
    %v731 = vld [vmem:[%s11 + $0x18] sm:$0xff]
    %v732 = vld [vmem:[%s11 + $0x20] sm:$0xff]
    %v733 = vld [vmem:[%s11 + $0x28] sm:$0xff]
    %v734 = vld [vmem:[%s11 + $0x30] sm:$0xff]
    %v735 = vld [vmem:[%s11 + $0x38] sm:$0xff]
    %v736 = vld [vmem:[%s11 + $0x40] sm:$0xff]
    %v737 = vld [vmem:[%s11 + $0x48] sm:$0xff]
    %v738 = vld [vmem:[%s11 + $0x50] sm:$0xff]
    %v739 = vld [vmem:[%s11 + $0x58] sm:$0xff]
    %v740 = vld [vmem:[%s11 + $0x60] sm:$0xff]
    %v741 = vld [vmem:[%s11 + $0x68] sm:$0xff]
    %v742 = vld [vmem:[%s11 + $0x70] sm:$0xff]
    %v743 = vld [vmem:[%s11 + $0x78] sm:$0xff]
    %v744 = vld [vmem:[%s12] sm:$0x1]
    %v746 = vlaneseq
    %v747 = vshrl.u32 %v746, 7
    %v748 = vsub.s32 0, %v747
    %v749 = vrot.slane %v744, %v748
    %751 = vmatprep.subr.mxu0 0.0
    %752 = vmatpush1.msra.mxu0 %v743
    %753 = vmatprep.subr.mxu0 0.0
    %754 = vmatpush1.msra.mxu0 %v742
    %755 = vmatprep.subr.mxu0 0.0
    %756 = vmatpush1.msra.mxu0 %v741
    %757 = vmatprep.subr.mxu0 0.0
    %758 = vmatpush1.msra.mxu0 %v740
    %759 = vmatprep.subr.mxu0 0.0
    %760 = vmatpush1.msra.mxu0 %v739
    %761 = vmatprep.subr.mxu0 0.0
    %762 = vmatpush1.msra.mxu0 %v738
    %763 = vmatprep.subr.mxu0 0.0
    %764 = vmatpush1.msra.mxu0 %v737
    %765 = vmatprep.subr.mxu0 0.0
    %766 = vmatpush1.msra.mxu0 %v736
    %767 = vmatprep.subr.mxu0 0.0
    %768 = vmatpush1.msra.mxu0 %v735
    %769 = vmatprep.subr.mxu0 0.0
    %770 = vmatpush1.msra.mxu0 %v734
    %771 = vmatprep.subr.mxu0 0.0
    %772 = vmatpush1.msra.mxu0 %v733
    %773 = vmatprep.subr.mxu0 0.0
    %774 = vmatpush1.msra.mxu0 %v732
    %775 = vmatprep.subr.mxu0 0.0
    %776 = vmatpush1.msra.mxu0 %v731
    %777 = vmatprep.subr.mxu0 0.0
    %778 = vmatpush1.msra.mxu0 %v730
    %779 = vmatprep.subr.mxu0 0.0
    %780 = vmatpush1.msra.mxu0 %v729
    %781 = vmatprep.subr.mxu0 0.0
    %782 = vmatpush1.msra.mxu0 %v728
    %783 = vmatprep.subr.mxu0 0.0
    %784 = vmatpush2.msra.mxu0 0.0
    %785 = vmatprep.subr.mxu0 0.0
    %786 = vmatpush2.msra.mxu0 0.0
    %787 = vmatprep.subr.mxu0 0.0
    %788 = vmatpush2.msra.mxu0 0.0
    %789 = vmatprep.subr.mxu0 0.0
    %790 = vmatpush2.msra.mxu0 0.0
    %791 = vmatprep.subr.mxu0 0.0
    %792 = vmatpush2.msra.mxu0 0.0
    %793 = vmatprep.subr.mxu0 0.0
    %794 = vmatpush2.msra.mxu0 0.0
    %795 = vmatprep.subr.mxu0 0.0
    %796 = vmatpush2.msra.mxu0 0.0
    %797 = vmatprep.subr.mxu0 0.0
    %798 = vmatpush2.msra.mxu0 0.0
    %799 = vmatprep.subr.mxu0 0.0
    %800 = vmatpush2.msra.mxu0 0.0
    %801 = vmatprep.subr.mxu0 0.0
    %802 = vmatpush2.msra.mxu0 0.0
    %803 = vmatprep.subr.mxu0 0.0
    %804 = vmatpush2.msra.mxu0 0.0
    %805 = vmatprep.subr.mxu0 0.0
    %806 = vmatpush2.msra.mxu0 0.0
    %807 = vmatprep.subr.mxu0 0.0
    %808 = vmatpush2.msra.mxu0 0.0
    %809 = vmatprep.subr.mxu0 0.0
    %810 = vmatpush2.msra.mxu0 0.0
    %811 = vmatprep.subr.mxu0 0.0
    %812 = vmatpush2.msra.mxu0 0.0
    %813 = vmatprep.subr.mxu0 0.0
    %814 = vmatpush2.msra.mxu0 0.0
    %815 = vmatprep.mubr.f32.mxu0 0.0
    %816 = vmatmul.mubr.f32.gmra.mxu0 %v727
    %v817 = vpop.f32.mrf.mxu0
    %v818 = vadd.f32 %v749, %v817
    %v819 = vpop.f32.mrf.mxu0
    %820 = vdwg.mxu0
    %v821 = vmax.f32 %v818, 0.0
    %v822 = vld [vmem:[%s13] sm:$0xff]
    %v823 = vld [vmem:[%s13 + $0x8] sm:$0xff]
    %v824 = vld [vmem:[%s13 + $0x10] sm:$0xff]
    %v825 = vld [vmem:[%s13 + $0x18] sm:$0xff]
    %v826 = vld [vmem:[%s13 + $0x20] sm:$0xff]
    %v827 = vld [vmem:[%s13 + $0x28] sm:$0xff]
    %v828 = vld [vmem:[%s13 + $0x30] sm:$0xff]
    %v829 = vld [vmem:[%s13 + $0x38] sm:$0xff]
    %v830 = vld [vmem:[%s13 + $0x40] sm:$0xff]
    %v831 = vld [vmem:[%s13 + $0x48] sm:$0xff]
    %v832 = vld [vmem:[%s13 + $0x50] sm:$0xff]
    %v833 = vld [vmem:[%s13 + $0x58] sm:$0xff]
    %v834 = vld [vmem:[%s13 + $0x60] sm:$0xff]
    %v835 = vld [vmem:[%s13 + $0x68] sm:$0xff]
    %v836 = vld [vmem:[%s13 + $0x70] sm:$0xff]
    %v837 = vld [vmem:[%s13 + $0x78] sm:$0xff]
    %v838 = vld [vmem:[%s14] sm:$0x1]
    %v840 = vlaneseq
    %v841 = vshrl.u32 %v840, 7
    %v842 = vsub.s32 0, %v841
    %v843 = vrot.slane %v838, %v842
    %845 = vmatprep.subr.mxu0 0.0
    %846 = vmatpush1.msra.mxu0 %v837
    %847 = vmatprep.subr.mxu0 0.0
    %848 = vmatpush1.msra.mxu0 %v836
    %849 = vmatprep.subr.mxu0 0.0
    %850 = vmatpush1.msra.mxu0 %v835
    %851 = vmatprep.subr.mxu0 0.0
    %852 = vmatpush1.msra.mxu0 %v834
    %853 = vmatprep.subr.mxu0 0.0
    %854 = vmatpush1.msra.mxu0 %v833
    %855 = vmatprep.subr.mxu0 0.0
    %856 = vmatpush1.msra.mxu0 %v832
    %857 = vmatprep.subr.mxu0 0.0
    %858 = vmatpush1.msra.mxu0 %v831
    %859 = vmatprep.subr.mxu0 0.0
    %860 = vmatpush1.msra.mxu0 %v830
    %861 = vmatprep.subr.mxu0 0.0
    %862 = vmatpush1.msra.mxu0 %v829
    %863 = vmatprep.subr.mxu0 0.0
    %864 = vmatpush1.msra.mxu0 %v828
    %865 = vmatprep.subr.mxu0 0.0
    %866 = vmatpush1.msra.mxu0 %v827
    %867 = vmatprep.subr.mxu0 0.0
    %868 = vmatpush1.msra.mxu0 %v826
    %869 = vmatprep.subr.mxu0 0.0
    %870 = vmatpush1.msra.mxu0 %v825
    %871 = vmatprep.subr.mxu0 0.0
    %872 = vmatpush1.msra.mxu0 %v824
    %873 = vmatprep.subr.mxu0 0.0
    %874 = vmatpush1.msra.mxu0 %v823
    %875 = vmatprep.subr.mxu0 0.0
    %876 = vmatpush1.msra.mxu0 %v822
    %877 = vmatprep.subr.mxu0 0.0
    %878 = vmatpush2.msra.mxu0 0.0
    %879 = vmatprep.subr.mxu0 0.0
    %880 = vmatpush2.msra.mxu0 0.0
    %881 = vmatprep.subr.mxu0 0.0
    %882 = vmatpush2.msra.mxu0 0.0
    %883 = vmatprep.subr.mxu0 0.0
    %884 = vmatpush2.msra.mxu0 0.0
    %885 = vmatprep.subr.mxu0 0.0
    %886 = vmatpush2.msra.mxu0 0.0
    %887 = vmatprep.subr.mxu0 0.0
    %888 = vmatpush2.msra.mxu0 0.0
    %889 = vmatprep.subr.mxu0 0.0
    %890 = vmatpush2.msra.mxu0 0.0
    %891 = vmatprep.subr.mxu0 0.0
    %892 = vmatpush2.msra.mxu0 0.0
    %893 = vmatprep.subr.mxu0 0.0
    %894 = vmatpush2.msra.mxu0 0.0
    %895 = vmatprep.subr.mxu0 0.0
    %896 = vmatpush2.msra.mxu0 0.0
    %897 = vmatprep.subr.mxu0 0.0
    %898 = vmatpush2.msra.mxu0 0.0
    %899 = vmatprep.subr.mxu0 0.0
    %900 = vmatpush2.msra.mxu0 0.0
    %901 = vmatprep.subr.mxu0 0.0
    %902 = vmatpush2.msra.mxu0 0.0
    %903 = vmatprep.subr.mxu0 0.0
    %904 = vmatpush2.msra.mxu0 0.0
    %905 = vmatprep.subr.mxu0 0.0
    %906 = vmatpush2.msra.mxu0 0.0
    %907 = vmatprep.subr.mxu0 0.0
    %908 = vmatpush2.msra.mxu0 0.0
    %909 = vmatprep.mubr.f32.mxu0 0.0
    %910 = vmatmul.mubr.f32.gmra.mxu0 %v821
    %v911 = vpop.f32.mrf.mxu0
    %v912 = vadd.f32 %v843, %v911
    %v913 = vpop.f32.mrf.mxu0
    %914 = vdwg.mxu0
    %v915 = vmax.f32 %v912, 0.0
    %v916 = vld [vmem:[%s15] sm:$0xff]
    %v917 = vld [vmem:[%s15 + $0x8] sm:$0xff]
    %v918 = vld [vmem:[%s15 + $0x10] sm:$0xff]
    %v919 = vld [vmem:[%s15 + $0x18] sm:$0xff]
    %v920 = vld [vmem:[%s15 + $0x20] sm:$0xff]
    %v921 = vld [vmem:[%s15 + $0x28] sm:$0xff]
    %v922 = vld [vmem:[%s15 + $0x30] sm:$0xff]
    %v923 = vld [vmem:[%s15 + $0x38] sm:$0xff]
    %v924 = vld [vmem:[%s15 + $0x40] sm:$0xff]
    %v925 = vld [vmem:[%s15 + $0x48] sm:$0xff]
    %v926 = vld [vmem:[%s15 + $0x50] sm:$0xff]
    %v927 = vld [vmem:[%s15 + $0x58] sm:$0xff]
    %v928 = vld [vmem:[%s15 + $0x60] sm:$0xff]
    %v929 = vld [vmem:[%s15 + $0x68] sm:$0xff]
    %v930 = vld [vmem:[%s15 + $0x70] sm:$0xff]
    %v931 = vld [vmem:[%s15 + $0x78] sm:$0xff]
    %v932 = vld [vmem:[%s16] sm:$0x1]
    %v934 = vlaneseq
    %v935 = vshrl.u32 %v934, 7
    %v936 = vsub.s32 0, %v935
    %v937 = vrot.slane %v932, %v936
    %939 = vmatprep.subr.mxu0 0.0
    %940 = vmatpush1.msra.mxu0 %v931
    %941 = vmatprep.subr.mxu0 0.0
    %942 = vmatpush1.msra.mxu0 %v930
    %943 = vmatprep.subr.mxu0 0.0
    %944 = vmatpush1.msra.mxu0 %v929
    %945 = vmatprep.subr.mxu0 0.0
    %946 = vmatpush1.msra.mxu0 %v928
    %947 = vmatprep.subr.mxu0 0.0
    %948 = vmatpush1.msra.mxu0 %v927
    %949 = vmatprep.subr.mxu0 0.0
    %950 = vmatpush1.msra.mxu0 %v926
    %951 = vmatprep.subr.mxu0 0.0
    %952 = vmatpush1.msra.mxu0 %v925
    %953 = vmatprep.subr.mxu0 0.0
    %954 = vmatpush1.msra.mxu0 %v924
    %955 = vmatprep.subr.mxu0 0.0
    %956 = vmatpush1.msra.mxu0 %v923
    %957 = vmatprep.subr.mxu0 0.0
    %958 = vmatpush1.msra.mxu0 %v922
    %959 = vmatprep.subr.mxu0 0.0
    %960 = vmatpush1.msra.mxu0 %v921
    %961 = vmatprep.subr.mxu0 0.0
    %962 = vmatpush1.msra.mxu0 %v920
    %963 = vmatprep.subr.mxu0 0.0
    %964 = vmatpush1.msra.mxu0 %v919
    %965 = vmatprep.subr.mxu0 0.0
    %966 = vmatpush1.msra.mxu0 %v918
    %967 = vmatprep.subr.mxu0 0.0
    %968 = vmatpush1.msra.mxu0 %v917
    %969 = vmatprep.subr.mxu0 0.0
    %970 = vmatpush1.msra.mxu0 %v916
    %971 = vmatprep.subr.mxu0 0.0
    %972 = vmatpush2.msra.mxu0 0.0
    %973 = vmatprep.subr.mxu0 0.0
    %974 = vmatpush2.msra.mxu0 0.0
    %975 = vmatprep.subr.mxu0 0.0
    %976 = vmatpush2.msra.mxu0 0.0
    %977 = vmatprep.subr.mxu0 0.0
    %978 = vmatpush2.msra.mxu0 0.0
    %979 = vmatprep.subr.mxu0 0.0
    %980 = vmatpush2.msra.mxu0 0.0
    %981 = vmatprep.subr.mxu0 0.0
    %982 = vmatpush2.msra.mxu0 0.0
    %983 = vmatprep.subr.mxu0 0.0
    %984 = vmatpush2.msra.mxu0 0.0
    %985 = vmatprep.subr.mxu0 0.0
    %986 = vmatpush2.msra.mxu0 0.0
    %987 = vmatprep.subr.mxu0 0.0
    %988 = vmatpush2.msra.mxu0 0.0
    %989 = vmatprep.subr.mxu0 0.0
    %990 = vmatpush2.msra.mxu0 0.0
    %991 = vmatprep.subr.mxu0 0.0
    %992 = vmatpush2.msra.mxu0 0.0
    %993 = vmatprep.subr.mxu0 0.0
    %994 = vmatpush2.msra.mxu0 0.0
    %995 = vmatprep.subr.mxu0 0.0
    %996 = vmatpush2.msra.mxu0 0.0
    %997 = vmatprep.subr.mxu0 0.0
    %998 = vmatpush2.msra.mxu0 0.0
    %999 = vmatprep.subr.mxu0 0.0
    %1000 = vmatpush2.msra.mxu0 0.0
    %1001 = vmatprep.subr.mxu0 0.0
    %1002 = vmatpush2.msra.mxu0 0.0
    %1003 = vmatprep.mubr.f32.mxu0 0.0
    %1004 = vmatmul.mubr.f32.gmra.mxu0 %v915
    %v1005 = vpop.f32.mrf.mxu0
    %v1006 = vadd.f32 %v937, %v1005
    %v1007 = vpop.f32.mrf.mxu0
    %1008 = vdwg.mxu0
    %v1009 = vmax.f32 %v1006, 0.0
    %v1010 = vld [vmem:[%s17] sm:$0xff]
    %v1011 = vld [vmem:[%s17 + $0x8] sm:$0xff]
    %v1012 = vld [vmem:[%s17 + $0x10] sm:$0xff]
    %v1013 = vld [vmem:[%s17 + $0x18] sm:$0xff]
    %v1014 = vld [vmem:[%s17 + $0x20] sm:$0xff]
    %v1015 = vld [vmem:[%s17 + $0x28] sm:$0xff]
    %v1016 = vld [vmem:[%s17 + $0x30] sm:$0xff]
    %v1017 = vld [vmem:[%s17 + $0x38] sm:$0xff]
    %v1018 = vld [vmem:[%s17 + $0x40] sm:$0xff]
    %v1019 = vld [vmem:[%s17 + $0x48] sm:$0xff]
    %v1020 = vld [vmem:[%s17 + $0x50] sm:$0xff]
    %v1021 = vld [vmem:[%s17 + $0x58] sm:$0xff]
    %v1022 = vld [vmem:[%s17 + $0x60] sm:$0xff]
    %v1023 = vld [vmem:[%s17 + $0x68] sm:$0xff]
    %v1024 = vld [vmem:[%s17 + $0x70] sm:$0xff]
    %v1025 = vld [vmem:[%s17 + $0x78] sm:$0xff]
    %v1026 = vld [vmem:[%s18] sm:$0x1]
    %v1028 = vlaneseq
    %v1029 = vshrl.u32 %v1028, 7
    %v1030 = vsub.s32 0, %v1029
    %v1031 = vrot.slane %v1026, %v1030
    %1033 = vmatprep.subr.mxu0 0.0
    %1034 = vmatpush1.msra.mxu0 %v1025
    %1035 = vmatprep.subr.mxu0 0.0
    %1036 = vmatpush1.msra.mxu0 %v1024
    %1037 = vmatprep.subr.mxu0 0.0
    %1038 = vmatpush1.msra.mxu0 %v1023
    %1039 = vmatprep.subr.mxu0 0.0
    %1040 = vmatpush1.msra.mxu0 %v1022
    %1041 = vmatprep.subr.mxu0 0.0
    %1042 = vmatpush1.msra.mxu0 %v1021
    %1043 = vmatprep.subr.mxu0 0.0
    %1044 = vmatpush1.msra.mxu0 %v1020
    %1045 = vmatprep.subr.mxu0 0.0
    %1046 = vmatpush1.msra.mxu0 %v1019
    %1047 = vmatprep.subr.mxu0 0.0
    %1048 = vmatpush1.msra.mxu0 %v1018
    %1049 = vmatprep.subr.mxu0 0.0
    %1050 = vmatpush1.msra.mxu0 %v1017
    %1051 = vmatprep.subr.mxu0 0.0
    %1052 = vmatpush1.msra.mxu0 %v1016
    %1053 = vmatprep.subr.mxu0 0.0
    %1054 = vmatpush1.msra.mxu0 %v1015
    %1055 = vmatprep.subr.mxu0 0.0
    %1056 = vmatpush1.msra.mxu0 %v1014
    %1057 = vmatprep.subr.mxu0 0.0
    %1058 = vmatpush1.msra.mxu0 %v1013
    %1059 = vmatprep.subr.mxu0 0.0
    %1060 = vmatpush1.msra.mxu0 %v1012
    %1061 = vmatprep.subr.mxu0 0.0
    %1062 = vmatpush1.msra.mxu0 %v1011
    %1063 = vmatprep.subr.mxu0 0.0
    %1064 = vmatpush1.msra.mxu0 %v1010
    %1065 = vmatprep.subr.mxu0 0.0
    %1066 = vmatpush2.msra.mxu0 0.0
    %1067 = vmatprep.subr.mxu0 0.0
    %1068 = vmatpush2.msra.mxu0 0.0
    %1069 = vmatprep.subr.mxu0 0.0
    %1070 = vmatpush2.msra.mxu0 0.0
    %1071 = vmatprep.subr.mxu0 0.0
    %1072 = vmatpush2.msra.mxu0 0.0
    %1073 = vmatprep.subr.mxu0 0.0
    %1074 = vmatpush2.msra.mxu0 0.0
    %1075 = vmatprep.subr.mxu0 0.0
    %1076 = vmatpush2.msra.mxu0 0.0
    %1077 = vmatprep.subr.mxu0 0.0
    %1078 = vmatpush2.msra.mxu0 0.0
    %1079 = vmatprep.subr.mxu0 0.0
    %1080 = vmatpush2.msra.mxu0 0.0
    %1081 = vmatprep.subr.mxu0 0.0
    %1082 = vmatpush2.msra.mxu0 0.0
    %1083 = vmatprep.subr.mxu0 0.0
    %1084 = vmatpush2.msra.mxu0 0.0
    %1085 = vmatprep.subr.mxu0 0.0
    %1086 = vmatpush2.msra.mxu0 0.0
    %1087 = vmatprep.subr.mxu0 0.0
    %1088 = vmatpush2.msra.mxu0 0.0
    %1089 = vmatprep.subr.mxu0 0.0
    %1090 = vmatpush2.msra.mxu0 0.0
    %1091 = vmatprep.subr.mxu0 0.0
    %1092 = vmatpush2.msra.mxu0 0.0
    %1093 = vmatprep.subr.mxu0 0.0
    %1094 = vmatpush2.msra.mxu0 0.0
    %1095 = vmatprep.subr.mxu0 0.0
    %1096 = vmatpush2.msra.mxu0 0.0
    %1097 = vmatprep.mubr.f32.mxu0 0.0
    %1098 = vmatmul.mubr.f32.gmra.mxu0 %v1009
    %v1099 = vpop.f32.mrf.mxu0
    %v1100 = vadd.f32 %v1031, %v1099
    %v1101 = vpop.f32.mrf.mxu0
    %1102 = vdwg.mxu0
    %v1103 = vmax.f32 %v1100, 0.0
    %v1104 = vld [vmem:[%s19] sm:$0xff]
    %v1105 = vld [vmem:[%s19 + $0x8] sm:$0xff]
    %v1106 = vld [vmem:[%s19 + $0x10] sm:$0xff]
    %v1107 = vld [vmem:[%s19 + $0x18] sm:$0xff]
    %v1108 = vld [vmem:[%s19 + $0x20] sm:$0xff]
    %v1109 = vld [vmem:[%s19 + $0x28] sm:$0xff]
    %v1110 = vld [vmem:[%s19 + $0x30] sm:$0xff]
    %v1111 = vld [vmem:[%s19 + $0x38] sm:$0xff]
    %v1112 = vld [vmem:[%s19 + $0x40] sm:$0xff]
    %v1113 = vld [vmem:[%s19 + $0x48] sm:$0xff]
    %v1114 = vld [vmem:[%s19 + $0x50] sm:$0xff]
    %v1115 = vld [vmem:[%s19 + $0x58] sm:$0xff]
    %v1116 = vld [vmem:[%s19 + $0x60] sm:$0xff]
    %v1117 = vld [vmem:[%s19 + $0x68] sm:$0xff]
    %v1118 = vld [vmem:[%s19 + $0x70] sm:$0xff]
    %v1119 = vld [vmem:[%s19 + $0x78] sm:$0xff]
    %v1120 = vld [vmem:[%s20] sm:$0x1]
    %v1122 = vlaneseq
    %v1123 = vshrl.u32 %v1122, 7
    %v1124 = vsub.s32 0, %v1123
    %v1125 = vrot.slane %v1120, %v1124
    %1127 = vmatprep.subr.mxu0 0.0
    %1128 = vmatpush1.msra.mxu0 %v1119
    %1129 = vmatprep.subr.mxu0 0.0
    %1130 = vmatpush1.msra.mxu0 %v1118
    %1131 = vmatprep.subr.mxu0 0.0
    %1132 = vmatpush1.msra.mxu0 %v1117
    %1133 = vmatprep.subr.mxu0 0.0
    %1134 = vmatpush1.msra.mxu0 %v1116
    %1135 = vmatprep.subr.mxu0 0.0
    %1136 = vmatpush1.msra.mxu0 %v1115
    %1137 = vmatprep.subr.mxu0 0.0
    %1138 = vmatpush1.msra.mxu0 %v1114
    %1139 = vmatprep.subr.mxu0 0.0
    %1140 = vmatpush1.msra.mxu0 %v1113
    %1141 = vmatprep.subr.mxu0 0.0
    %1142 = vmatpush1.msra.mxu0 %v1112
    %1143 = vmatprep.subr.mxu0 0.0
    %1144 = vmatpush1.msra.mxu0 %v1111
    %1145 = vmatprep.subr.mxu0 0.0
    %1146 = vmatpush1.msra.mxu0 %v1110
    %1147 = vmatprep.subr.mxu0 0.0
    %1148 = vmatpush1.msra.mxu0 %v1109
    %1149 = vmatprep.subr.mxu0 0.0
    %1150 = vmatpush1.msra.mxu0 %v1108
    %1151 = vmatprep.subr.mxu0 0.0
    %1152 = vmatpush1.msra.mxu0 %v1107
    %1153 = vmatprep.subr.mxu0 0.0
    %1154 = vmatpush1.msra.mxu0 %v1106
    %1155 = vmatprep.subr.mxu0 0.0
    %1156 = vmatpush1.msra.mxu0 %v1105
    %1157 = vmatprep.subr.mxu0 0.0
    %1158 = vmatpush1.msra.mxu0 %v1104
    %1159 = vmatprep.subr.mxu0 0.0
    %1160 = vmatpush2.msra.mxu0 0.0
    %1161 = vmatprep.subr.mxu0 0.0
    %1162 = vmatpush2.msra.mxu0 0.0
    %1163 = vmatprep.subr.mxu0 0.0
    %1164 = vmatpush2.msra.mxu0 0.0
    %1165 = vmatprep.subr.mxu0 0.0
    %1166 = vmatpush2.msra.mxu0 0.0
    %1167 = vmatprep.subr.mxu0 0.0
    %1168 = vmatpush2.msra.mxu0 0.0
    %1169 = vmatprep.subr.mxu0 0.0
    %1170 = vmatpush2.msra.mxu0 0.0
    %1171 = vmatprep.subr.mxu0 0.0
    %1172 = vmatpush2.msra.mxu0 0.0
    %1173 = vmatprep.subr.mxu0 0.0
    %1174 = vmatpush2.msra.mxu0 0.0
    %1175 = vmatprep.subr.mxu0 0.0
    %1176 = vmatpush2.msra.mxu0 0.0
    %1177 = vmatprep.subr.mxu0 0.0
    %1178 = vmatpush2.msra.mxu0 0.0
    %1179 = vmatprep.subr.mxu0 0.0
    %1180 = vmatpush2.msra.mxu0 0.0
    %1181 = vmatprep.subr.mxu0 0.0
    %1182 = vmatpush2.msra.mxu0 0.0
    %1183 = vmatprep.subr.mxu0 0.0
    %1184 = vmatpush2.msra.mxu0 0.0
    %1185 = vmatprep.subr.mxu0 0.0
    %1186 = vmatpush2.msra.mxu0 0.0
    %1187 = vmatprep.subr.mxu0 0.0
    %1188 = vmatpush2.msra.mxu0 0.0
    %1189 = vmatprep.subr.mxu0 0.0
    %1190 = vmatpush2.msra.mxu0 0.0
    %1191 = vmatprep.mubr.f32.mxu0 0.0
    %1192 = vmatmul.mubr.f32.gmra.mxu0 %v1103
    %v1193 = vpop.f32.mrf.mxu0
    %v1194 = vadd.f32 %v1125, %v1193
    %v1195 = vpop.f32.mrf.mxu0
    %1196 = vdwg.mxu0
    %v1197 = vmax.f32 %v1194, 0.0
    %v1198 = vld [vmem:[%s21] sm:$0xff]
    %v1199 = vld [vmem:[%s21 + $0x8] sm:$0xff]
    %v1200 = vld [vmem:[%s21 + $0x10] sm:$0xff]
    %v1201 = vld [vmem:[%s21 + $0x18] sm:$0xff]
    %v1202 = vld [vmem:[%s21 + $0x20] sm:$0xff]
    %v1203 = vld [vmem:[%s21 + $0x28] sm:$0xff]
    %v1204 = vld [vmem:[%s21 + $0x30] sm:$0xff]
    %v1205 = vld [vmem:[%s21 + $0x38] sm:$0xff]
    %v1206 = vld [vmem:[%s21 + $0x40] sm:$0xff]
    %v1207 = vld [vmem:[%s21 + $0x48] sm:$0xff]
    %v1208 = vld [vmem:[%s21 + $0x50] sm:$0xff]
    %v1209 = vld [vmem:[%s21 + $0x58] sm:$0xff]
    %v1210 = vld [vmem:[%s21 + $0x60] sm:$0xff]
    %v1211 = vld [vmem:[%s21 + $0x68] sm:$0xff]
    %v1212 = vld [vmem:[%s21 + $0x70] sm:$0xff]
    %v1213 = vld [vmem:[%s21 + $0x78] sm:$0xff]
    %v1214 = vld [vmem:[%s21 + $0x80] sm:$0xff]
    %v1215 = vld [vmem:[%s21 + $0x88] sm:$0xff]
    %v1216 = vld [vmem:[%s21 + $0x90] sm:$0xff]
    %v1217 = vld [vmem:[%s21 + $0x98] sm:$0xff]
    %v1218 = vld [vmem:[%s21 + $0xa0] sm:$0xff]
    %v1219 = vld [vmem:[%s21 + $0xa8] sm:$0xff]
    %v1220 = vld [vmem:[%s21 + $0xb0] sm:$0xff]
    %v1221 = vld [vmem:[%s21 + $0xb8] sm:$0xff]
    %v1222 = vld [vmem:[%s21 + $0xc0] sm:$0xff]
    %v1223 = vld [vmem:[%s21 + $0xc8] sm:$0xff]
    %v1224 = vld [vmem:[%s21 + $0xd0] sm:$0xff]
    %v1225 = vld [vmem:[%s21 + $0xd8] sm:$0xff]
    %v1226 = vld [vmem:[%s21 + $0xe0] sm:$0xff]
    %v1227 = vld [vmem:[%s21 + $0xe8] sm:$0xff]
    %v1228 = vld [vmem:[%s21 + $0xf0] sm:$0xff]
    %v1229 = vld [vmem:[%s21 + $0xf8] sm:$0xff]
    %v1230 = vld [vmem:[%s22] sm:$0x3]
    %v1232 = vlaneseq
    %v1233 = vshrl.u32 %v1232, 7
    %v1234 = vsub.s32 0, %v1233
    %v1235 = vrot.slane %v1230, %v1234
    %v1236 = vlaneseq
    %v1237 = vshrl.u32 %v1236, 7
    %v1238 = vsub.s32 1, %v1237
    %v1239 = vrot.slane %v1230, %v1238
    %1242 = vmatprep.subr.mxu0 %v1229
    %1243 = vmatpush1.msra.mxu0 %v1228
    %1244 = vmatprep.subr.mxu0 %v1227
    %1245 = vmatpush1.msra.mxu0 %v1226
    %1246 = vmatprep.subr.mxu0 %v1225
    %1247 = vmatpush1.msra.mxu0 %v1224
    %1248 = vmatprep.subr.mxu0 %v1223
    %1249 = vmatpush1.msra.mxu0 %v1222
    %1250 = vmatprep.subr.mxu0 %v1221
    %1251 = vmatpush1.msra.mxu0 %v1220
    %1252 = vmatprep.subr.mxu0 %v1219
    %1253 = vmatpush1.msra.mxu0 %v1218
    %1254 = vmatprep.subr.mxu0 %v1217
    %1255 = vmatpush1.msra.mxu0 %v1216
    %1256 = vmatprep.subr.mxu0 %v1215
    %1257 = vmatpush1.msra.mxu0 %v1214
    %1258 = vmatprep.subr.mxu0 %v1213
    %1259 = vmatpush1.msra.mxu0 %v1212
    %1260 = vmatprep.subr.mxu0 %v1211
    %1261 = vmatpush1.msra.mxu0 %v1210
    %1262 = vmatprep.subr.mxu0 %v1209
    %1263 = vmatpush1.msra.mxu0 %v1208
    %1264 = vmatprep.subr.mxu0 %v1207
    %1265 = vmatpush1.msra.mxu0 %v1206
    %1266 = vmatprep.subr.mxu0 %v1205
    %1267 = vmatpush1.msra.mxu0 %v1204
    %1268 = vmatprep.subr.mxu0 %v1203
    %1269 = vmatpush1.msra.mxu0 %v1202
    %1270 = vmatprep.subr.mxu0 %v1201
    %1271 = vmatpush1.msra.mxu0 %v1200
    %1272 = vmatprep.subr.mxu0 %v1199
    %1273 = vmatpush1.msra.mxu0 %v1198
    %1274 = vmatprep.subr.mxu0 0.0
    %1275 = vmatpush2.msra.mxu0 0.0
    %1276 = vmatprep.subr.mxu0 0.0
    %1277 = vmatpush2.msra.mxu0 0.0
    %1278 = vmatprep.subr.mxu0 0.0
    %1279 = vmatpush2.msra.mxu0 0.0
    %1280 = vmatprep.subr.mxu0 0.0
    %1281 = vmatpush2.msra.mxu0 0.0
    %1282 = vmatprep.subr.mxu0 0.0
    %1283 = vmatpush2.msra.mxu0 0.0
    %1284 = vmatprep.subr.mxu0 0.0
    %1285 = vmatpush2.msra.mxu0 0.0
    %1286 = vmatprep.subr.mxu0 0.0
    %1287 = vmatpush2.msra.mxu0 0.0
    %1288 = vmatprep.subr.mxu0 0.0
    %1289 = vmatpush2.msra.mxu0 0.0
    %1290 = vmatprep.subr.mxu0 0.0
    %1291 = vmatpush2.msra.mxu0 0.0
    %1292 = vmatprep.subr.mxu0 0.0
    %1293 = vmatpush2.msra.mxu0 0.0
    %1294 = vmatprep.subr.mxu0 0.0
    %1295 = vmatpush2.msra.mxu0 0.0
    %1296 = vmatprep.subr.mxu0 0.0
    %1297 = vmatpush2.msra.mxu0 0.0
    %1298 = vmatprep.subr.mxu0 0.0
    %1299 = vmatpush2.msra.mxu0 0.0
    %1300 = vmatprep.subr.mxu0 0.0
    %1301 = vmatpush2.msra.mxu0 0.0
    %1302 = vmatprep.subr.mxu0 0.0
    %1303 = vmatpush2.msra.mxu0 0.0
    %1304 = vmatprep.subr.mxu0 0.0
    %1305 = vmatpush2.msra.mxu0 0.0
    %1306 = vmatprep.mubr.f32.mxu0 0.0
    %1307 = vmatmul.mubr.f32.gmra.mxu0 %v1197
    %v1308 = vpop.f32.mrf.mxu0
    %v1309 = vadd.f32 %v1235, %v1308
    %v1310 = vpop.f32.mrf.mxu0
    %v1311 = vadd.f32 %v1239, %v1310
    %1312 = vdwg.mxu0
    %v1313 = vmax.f32 %v1309, 0.0
    %v1314 = vmax.f32 %v1311, 0.0
    %v1315 = vld [vmem:[%s23] sm:$0xff]
    %v1316 = vld [vmem:[%s23 + $0x8] sm:$0xff]
    %v1317 = vld [vmem:[%s23 + $0x10] sm:$0xff]
    %v1318 = vld [vmem:[%s23 + $0x18] sm:$0xff]
    %v1319 = vld [vmem:[%s23 + $0x20] sm:$0xff]
    %v1320 = vld [vmem:[%s23 + $0x28] sm:$0xff]
    %v1321 = vld [vmem:[%s23 + $0x30] sm:$0xff]
    %v1322 = vld [vmem:[%s23 + $0x38] sm:$0xff]
    %v1323 = vld [vmem:[%s23 + $0x40] sm:$0xff]
    %v1324 = vld [vmem:[%s23 + $0x48] sm:$0xff]
    %v1325 = vld [vmem:[%s23 + $0x50] sm:$0xff]
    %v1326 = vld [vmem:[%s23 + $0x58] sm:$0xff]
    %v1327 = vld [vmem:[%s23 + $0x60] sm:$0xff]
    %v1328 = vld [vmem:[%s23 + $0x68] sm:$0xff]
    %v1329 = vld [vmem:[%s23 + $0x70] sm:$0xff]
    %v1330 = vld [vmem:[%s23 + $0x78] sm:$0xff]
    %v1331 = vld [vmem:[%s23 + $0x80] sm:$0xff]
    %v1332 = vld [vmem:[%s23 + $0x88] sm:$0xff]
    %v1333 = vld [vmem:[%s23 + $0x90] sm:$0xff]
    %v1334 = vld [vmem:[%s23 + $0x98] sm:$0xff]
    %v1335 = vld [vmem:[%s23 + $0xa0] sm:$0xff]
    %v1336 = vld [vmem:[%s23 + $0xa8] sm:$0xff]
    %v1337 = vld [vmem:[%s23 + $0xb0] sm:$0xff]
    %v1338 = vld [vmem:[%s23 + $0xb8] sm:$0xff]
    %v1339 = vld [vmem:[%s23 + $0xc0] sm:$0xff]
    %v1340 = vld [vmem:[%s23 + $0xc8] sm:$0xff]
    %v1341 = vld [vmem:[%s23 + $0xd0] sm:$0xff]
    %v1342 = vld [vmem:[%s23 + $0xd8] sm:$0xff]
    %v1343 = vld [vmem:[%s23 + $0xe0] sm:$0xff]
    %v1344 = vld [vmem:[%s23 + $0xe8] sm:$0xff]
    %v1345 = vld [vmem:[%s23 + $0xf0] sm:$0xff]
    %v1346 = vld [vmem:[%s23 + $0xf8] sm:$0xff]
    %v1347 = vld [vmem:[%s23 + $0x100] sm:$0xff]
    %v1348 = vld [vmem:[%s23 + $0x108] sm:$0xff]
    %v1349 = vld [vmem:[%s23 + $0x110] sm:$0xff]
    %v1350 = vld [vmem:[%s23 + $0x118] sm:$0xff]
    %v1351 = vld [vmem:[%s23 + $0x120] sm:$0xff]
    %v1352 = vld [vmem:[%s23 + $0x128] sm:$0xff]
    %v1353 = vld [vmem:[%s23 + $0x130] sm:$0xff]
    %v1354 = vld [vmem:[%s23 + $0x138] sm:$0xff]
    %v1355 = vld [vmem:[%s23 + $0x140] sm:$0xff]
    %v1356 = vld [vmem:[%s23 + $0x148] sm:$0xff]
    %v1357 = vld [vmem:[%s23 + $0x150] sm:$0xff]
    %v1358 = vld [vmem:[%s23 + $0x158] sm:$0xff]
    %v1359 = vld [vmem:[%s23 + $0x160] sm:$0xff]
    %v1360 = vld [vmem:[%s23 + $0x168] sm:$0xff]
    %v1361 = vld [vmem:[%s23 + $0x170] sm:$0xff]
    %v1362 = vld [vmem:[%s23 + $0x178] sm:$0xff]
    %v1363 = vld [vmem:[%s23 + $0x180] sm:$0xff]
    %v1364 = vld [vmem:[%s23 + $0x188] sm:$0xff]
    %v1365 = vld [vmem:[%s23 + $0x190] sm:$0xff]
    %v1366 = vld [vmem:[%s23 + $0x198] sm:$0xff]
    %v1367 = vld [vmem:[%s23 + $0x1a0] sm:$0xff]
    %v1368 = vld [vmem:[%s23 + $0x1a8] sm:$0xff]
    %v1369 = vld [vmem:[%s23 + $0x1b0] sm:$0xff]
    %v1370 = vld [vmem:[%s23 + $0x1b8] sm:$0xff]
    %v1371 = vld [vmem:[%s23 + $0x1c0] sm:$0xff]
    %v1372 = vld [vmem:[%s23 + $0x1c8] sm:$0xff]
    %v1373 = vld [vmem:[%s23 + $0x1d0] sm:$0xff]
    %v1374 = vld [vmem:[%s23 + $0x1d8] sm:$0xff]
    %v1375 = vld [vmem:[%s23 + $0x1e0] sm:$0xff]
    %v1376 = vld [vmem:[%s23 + $0x1e8] sm:$0xff]
    %v1377 = vld [vmem:[%s23 + $0x1f0] sm:$0xff]
    %v1378 = vld [vmem:[%s23 + $0x1f8] sm:$0xff]
    %v1379 = vld [vmem:[%s23 + $0x200] sm:$0xff]
    %v1380 = vld [vmem:[%s23 + $0x208] sm:$0xff]
    %v1381 = vld [vmem:[%s23 + $0x210] sm:$0xff]
    %v1382 = vld [vmem:[%s23 + $0x218] sm:$0xff]
    %v1383 = vld [vmem:[%s23 + $0x220] sm:$0xff]
    %v1384 = vld [vmem:[%s23 + $0x228] sm:$0xff]
    %v1385 = vld [vmem:[%s23 + $0x230] sm:$0xff]
    %v1386 = vld [vmem:[%s23 + $0x238] sm:$0xff]
    %v1387 = vld [vmem:[%s23 + $0x240] sm:$0xff]
    %v1388 = vld [vmem:[%s23 + $0x248] sm:$0xff]
    %v1389 = vld [vmem:[%s23 + $0x250] sm:$0xff]
    %v1390 = vld [vmem:[%s23 + $0x258] sm:$0xff]
    %v1391 = vld [vmem:[%s23 + $0x260] sm:$0xff]
    %v1392 = vld [vmem:[%s23 + $0x268] sm:$0xff]
    %v1393 = vld [vmem:[%s23 + $0x270] sm:$0xff]
    %v1394 = vld [vmem:[%s23 + $0x278] sm:$0xff]
    %v1395 = vld [vmem:[%s23 + $0x280] sm:$0xff]
    %v1396 = vld [vmem:[%s23 + $0x288] sm:$0xff]
    %v1397 = vld [vmem:[%s23 + $0x290] sm:$0xff]
    %v1398 = vld [vmem:[%s23 + $0x298] sm:$0xff]
    %v1399 = vld [vmem:[%s23 + $0x2a0] sm:$0xff]
    %v1400 = vld [vmem:[%s23 + $0x2a8] sm:$0xff]
    %v1401 = vld [vmem:[%s23 + $0x2b0] sm:$0xff]
    %v1402 = vld [vmem:[%s23 + $0x2b8] sm:$0xff]
    %v1403 = vld [vmem:[%s23 + $0x2c0] sm:$0xff]
    %v1404 = vld [vmem:[%s23 + $0x2c8] sm:$0xff]
    %v1405 = vld [vmem:[%s23 + $0x2d0] sm:$0xff]
    %v1406 = vld [vmem:[%s23 + $0x2d8] sm:$0xff]
    %v1407 = vld [vmem:[%s23 + $0x2e0] sm:$0xff]
    %v1408 = vld [vmem:[%s23 + $0x2e8] sm:$0xff]
    %v1409 = vld [vmem:[%s23 + $0x2f0] sm:$0xff]
    %v1410 = vld [vmem:[%s23 + $0x2f8] sm:$0xff]
    %v1411 = vld [vmem:[%s24] sm:$0x7]
    %v1413 = vlaneseq
    %v1414 = vshrl.u32 %v1413, 7
    %v1415 = vsub.s32 0, %v1414
    %v1416 = vrot.slane %v1411, %v1415
    %v1417 = vlaneseq
    %v1418 = vshrl.u32 %v1417, 7
    %v1419 = vsub.s32 1, %v1418
    %v1420 = vrot.slane %v1411, %v1419
    %v1421 = vlaneseq
    %v1422 = vshrl.u32 %v1421, 7
    %v1423 = vsub.s32 2, %v1422
    %v1424 = vrot.slane %v1411, %v1423
    %1428 = vmatprep.subr.mxu0 %v1361
    %1429 = vmatpush1.msra.mxu0 %v1360
    %1430 = vmatprep.subr.mxu0 %v1358
    %1431 = vmatpush1.msra.mxu0 %v1357
    %1432 = vmatprep.subr.mxu0 %v1355
    %1433 = vmatpush1.msra.mxu0 %v1354
    %1434 = vmatprep.subr.mxu0 %v1352
    %1435 = vmatpush1.msra.mxu0 %v1351
    %1436 = vmatprep.subr.mxu0 %v1349
    %1437 = vmatpush1.msra.mxu0 %v1348
    %1438 = vmatprep.subr.mxu0 %v1346
    %1439 = vmatpush1.msra.mxu0 %v1345
    %1440 = vmatprep.subr.mxu0 %v1343
    %1441 = vmatpush1.msra.mxu0 %v1342
    %1442 = vmatprep.subr.mxu0 %v1340
    %1443 = vmatpush1.msra.mxu0 %v1339
    %1444 = vmatprep.subr.mxu0 %v1337
    %1445 = vmatpush1.msra.mxu0 %v1336
    %1446 = vmatprep.subr.mxu0 %v1334
    %1447 = vmatpush1.msra.mxu0 %v1333
    %1448 = vmatprep.subr.mxu0 %v1331
    %1449 = vmatpush1.msra.mxu0 %v1330
    %1450 = vmatprep.subr.mxu0 %v1328
    %1451 = vmatpush1.msra.mxu0 %v1327
    %1452 = vmatprep.subr.mxu0 %v1325
    %1453 = vmatpush1.msra.mxu0 %v1324
    %1454 = vmatprep.subr.mxu0 %v1322
    %1455 = vmatpush1.msra.mxu0 %v1321
    %1456 = vmatprep.subr.mxu0 %v1319
    %1457 = vmatpush1.msra.mxu0 %v1318
    %1458 = vmatprep.subr.mxu0 %v1316
    %1459 = vmatpush1.msra.mxu0 %v1315
    %1460 = vmatprep.subr.mxu0 %v1409
    %1461 = vmatpush2.msra.mxu0 %v1408
    %1462 = vmatprep.subr.mxu0 %v1406
    %1463 = vmatpush2.msra.mxu0 %v1405
    %1464 = vmatprep.subr.mxu0 %v1403
    %1465 = vmatpush2.msra.mxu0 %v1402
    %1466 = vmatprep.subr.mxu0 %v1400
    %1467 = vmatpush2.msra.mxu0 %v1399
    %1468 = vmatprep.subr.mxu0 %v1397
    %1469 = vmatpush2.msra.mxu0 %v1396
    %1470 = vmatprep.subr.mxu0 %v1394
    %1471 = vmatpush2.msra.mxu0 %v1393
    %1472 = vmatprep.subr.mxu0 %v1391
    %1473 = vmatpush2.msra.mxu0 %v1390
    %1474 = vmatprep.subr.mxu0 %v1388
    %1475 = vmatpush2.msra.mxu0 %v1387
    %1476 = vmatprep.subr.mxu0 %v1385
    %1477 = vmatpush2.msra.mxu0 %v1384
    %1478 = vmatprep.subr.mxu0 %v1382
    %1479 = vmatpush2.msra.mxu0 %v1381
    %1480 = vmatprep.subr.mxu0 %v1379
    %1481 = vmatpush2.msra.mxu0 %v1378
    %1482 = vmatprep.subr.mxu0 %v1376
    %1483 = vmatpush2.msra.mxu0 %v1375
    %1484 = vmatprep.subr.mxu0 %v1373
    %1485 = vmatpush2.msra.mxu0 %v1372
    %1486 = vmatprep.subr.mxu0 %v1370
    %1487 = vmatpush2.msra.mxu0 %v1369
    %1488 = vmatprep.subr.mxu0 %v1367
    %1489 = vmatpush2.msra.mxu0 %v1366
    %1490 = vmatprep.subr.mxu0 %v1364
    %1491 = vmatpush2.msra.mxu0 %v1363
    %1492 = vmatprep.mubr.f32.mxu0 %v1314
    %1493 = vmatmul.mubr.f32.gmra.mxu0 %v1313
    %v1494 = vpop.f32.mrf.mxu0
    %v1495 = vadd.f32 %v1416, %v1494
    %v1496 = vpop.f32.mrf.mxu0
    %v1497 = vadd.f32 %v1420, %v1496
    %1498 = vdwg.mxu0
    %1499 = vmatprep.subr.mxu0 0.0
    %1500 = vmatpush1.msra.mxu0 %v1362
    %1501 = vmatprep.subr.mxu0 0.0
    %1502 = vmatpush1.msra.mxu0 %v1359
    %1503 = vmatprep.subr.mxu0 0.0
    %1504 = vmatpush1.msra.mxu0 %v1356
    %1505 = vmatprep.subr.mxu0 0.0
    %1506 = vmatpush1.msra.mxu0 %v1353
    %1507 = vmatprep.subr.mxu0 0.0
    %1508 = vmatpush1.msra.mxu0 %v1350
    %1509 = vmatprep.subr.mxu0 0.0
    %1510 = vmatpush1.msra.mxu0 %v1347
    %1511 = vmatprep.subr.mxu0 0.0
    %1512 = vmatpush1.msra.mxu0 %v1344
    %1513 = vmatprep.subr.mxu0 0.0
    %1514 = vmatpush1.msra.mxu0 %v1341
    %1515 = vmatprep.subr.mxu0 0.0
    %1516 = vmatpush1.msra.mxu0 %v1338
    %1517 = vmatprep.subr.mxu0 0.0
    %1518 = vmatpush1.msra.mxu0 %v1335
    %1519 = vmatprep.subr.mxu0 0.0
    %1520 = vmatpush1.msra.mxu0 %v1332
    %1521 = vmatprep.subr.mxu0 0.0
    %1522 = vmatpush1.msra.mxu0 %v1329
    %1523 = vmatprep.subr.mxu0 0.0
    %1524 = vmatpush1.msra.mxu0 %v1326
    %1525 = vmatprep.subr.mxu0 0.0
    %1526 = vmatpush1.msra.mxu0 %v1323
    %1527 = vmatprep.subr.mxu0 0.0
    %1528 = vmatpush1.msra.mxu0 %v1320
    %1529 = vmatprep.subr.mxu0 0.0
    %1530 = vmatpush1.msra.mxu0 %v1317
    %1531 = vmatprep.subr.mxu0 0.0
    %1532 = vmatpush2.msra.mxu0 %v1410
    %1533 = vmatprep.subr.mxu0 0.0
    %1534 = vmatpush2.msra.mxu0 %v1407
    %1535 = vmatprep.subr.mxu0 0.0
    %1536 = vmatpush2.msra.mxu0 %v1404
    %1537 = vmatprep.subr.mxu0 0.0
    %1538 = vmatpush2.msra.mxu0 %v1401
    %1539 = vmatprep.subr.mxu0 0.0
    %1540 = vmatpush2.msra.mxu0 %v1398
    %1541 = vmatprep.subr.mxu0 0.0
    %1542 = vmatpush2.msra.mxu0 %v1395
    %1543 = vmatprep.subr.mxu0 0.0
    %1544 = vmatpush2.msra.mxu0 %v1392
    %1545 = vmatprep.subr.mxu0 0.0
    %1546 = vmatpush2.msra.mxu0 %v1389
    %1547 = vmatprep.subr.mxu0 0.0
    %1548 = vmatpush2.msra.mxu0 %v1386
    %1549 = vmatprep.subr.mxu0 0.0
    %1550 = vmatpush2.msra.mxu0 %v1383
    %1551 = vmatprep.subr.mxu0 0.0
    %1552 = vmatpush2.msra.mxu0 %v1380
    %1553 = vmatprep.subr.mxu0 0.0
    %1554 = vmatpush2.msra.mxu0 %v1377
    %1555 = vmatprep.subr.mxu0 0.0
    %1556 = vmatpush2.msra.mxu0 %v1374
    %1557 = vmatprep.subr.mxu0 0.0
    %1558 = vmatpush2.msra.mxu0 %v1371
    %1559 = vmatprep.subr.mxu0 0.0
    %1560 = vmatpush2.msra.mxu0 %v1368
    %1561 = vmatprep.subr.mxu0 0.0
    %1562 = vmatpush2.msra.mxu0 %v1365
    %1563 = vmatprep.mubr.f32.mxu0 %v1314
    %1564 = vmatmul.mubr.f32.gmra.mxu0 %v1313
    %v1565 = vpop.f32.mrf.mxu0
    %v1566 = vadd.f32 %v1424, %v1565
    %v1567 = vpop.f32.mrf.mxu0
    %1568 = vdwg.mxu0
    %v1569 = vmax.f32 %v1495, 0.0
    %v1570 = vmax.f32 %v1497, 0.0
    %v1571 = vmax.f32 %v1566, 0.0
    %1572 = vst [vmem:[#allocation2] sm:$0xff] %v1569
    %1573 = vst [vmem:[#allocation2 + $0x8] sm:$0xff] %v1570
    %1574 = vst [vmem:[#allocation2 + $0x10] sm:$0xff] %v1571
    // Predicated region
    $region102: #{autoencoder_forward.1} parent=1 // pred_check
      _
    $region103: #{autoencoder_forward.1} parent=1 // pred_check_branch
      %1576 = sbr.rel (0) target = $region105
    $region104: #{autoencoder_forward.1} parent=1 // pred_region
      %s1578 = ssub.s32 384, 384
      %1579 = vsyncadd [#allocation3], %s1578
      %s1581 = sshll.u32 [#allocation2], 4
      %s1582 = int_to_ptr.vmem [resolvable:$true] %s1581
      %1584 = dma.vmem_to_hbm [thread:$0]  %s1582, 384, %s25, [#allocation3]
    $region105: #{autoencoder_forward.1} parent=1 // pred_fallthru
      _
    // Predicated region
    $region106: #{autoencoder_forward.1} parent=1 // pred_check
      _
    $region107: #{autoencoder_forward.1} parent=1 // pred_check_branch
      %1586 = sbr.rel (0) target = $region109
    $region108: #{autoencoder_forward.1} parent=1 // pred_region
      %1587 = dma.done [#allocation3], 384
    $region109: #{autoencoder_forward.1} parent=1 // pred_fallthru
      _
    %1588 = vsyncpa [#allocation3], 1

</llo_original>
